<compile_context>
chip_gen: v5e
topology: v5e:2x2
jax: 0.10.0
libtpu: 0.0.40
codegen_flags: <defaults>
</compile_context>

<pallas_src>
import numpy as np
import jax
import jax.numpy as jnp
from jax import lax
from jax.experimental import pallas as pl
from jax.experimental.pallas import tpu as pltpu


# ----------------------------- fit helpers (verbatim semantics) -------------
def dual_exponential(d, b1, b2, b3, b4):
    return b1 * np.exp(-b2 * d) + b3 * np.exp(-b4 * d)


def sqrt_fit(d, b1, b2):
    return b1 * d + b2


# ----------------------------- tiling helper ---------------------------------
_VMEM_BLOCK_BUDGET = 8 * 1024 * 1024  # conservative: fits v7x 64 MiB phys / default scoped VMEM


def _pick_channel_block(N, per_channel_bytes, budget=_VMEM_BLOCK_BUDGET):
    """Largest divisor of N whose per-grid-step VMEM footprint fits `budget`."""
    best = 1
    for c in range(1, N + 1):
        if N % c == 0 and c * per_channel_bytes <= budget:
            best = c
    return best


# ----------------------------- Pallas kernels -------------------------------
def _make_sep_blur2_kernel(K):
    """out = sep_blur(x, wg) + sep_blur(x, wm): depthwise 1-D cross-correlation
    along H then W, zero 'same' padding done in-kernel (VMEM halo scratch)."""
    pad = K // 2

    def kernel(x_ref, wg_ref, wm_ref, o_ref, hp_ref, wp_ref):
        Cb, H, W = o_ref.shape
        # in-kernel zero padding along H (sublane axis)
        hp_ref[...] = jnp.zeros_like(hp_ref)
        hp_ref[:, pad:pad + H, :] = x_ref[...]
        wg = wg_ref[...]                       # (Cb, 1, K)
        wm = wm_ref[...]
        # pass 1: conv along H, both weight sets share the shifted loads
        tg = jnp.zeros((Cb, H, W), jnp.float32)
        tm = jnp.zeros((Cb, H, W), jnp.float32)
        for k in range(K):                     # K small & static -> unrolled
            xs = hp_ref[:, k:k + H, :]
            tg = tg + wg[:, :, k:k + 1] * xs
            tm = tm + wm[:, :, k:k + 1] * xs

        # pass 2: conv along W (lane axis), per weight set (scratch reused)
        def conv_w(t, w):
            wp_ref[...] = jnp.zeros_like(wp_ref)
            wp_ref[:, :, pad:pad + W] = t
            acc = jnp.zeros((Cb, H, W), jnp.float32)
            for k in range(K):
                acc = acc + w[:, :, k:k + 1] * wp_ref[:, :, k:k + W]
            return acc

        o_ref[...] = (conv_w(tg, wg) + conv_w(tm, wm)).astype(o_ref.dtype)

    return kernel


def _make_sep_blur1_kernel(K):
    pad = K // 2

    def kernel(x_ref, w_ref, o_ref, hp_ref, wp_ref):
        Cb, H, W = o_ref.shape
        hp_ref[...] = jnp.zeros_like(hp_ref)
        hp_ref[:, pad:pad + H, :] = x_ref[...]
        w = w_ref[...]
        t = jnp.zeros((Cb, H, W), jnp.float32)
        for k in range(K):
            t = t + w[:, :, k:k + 1] * hp_ref[:, k:k + H, :]
        wp_ref[...] = jnp.zeros_like(wp_ref)
        wp_ref[:, :, pad:pad + W] = t
        acc = jnp.zeros((Cb, H, W), jnp.float32)
        for k in range(K):
            acc = acc + w[:, :, k:k + 1] * wp_ref[:, :, k:k + W]
        o_ref[...] = acc.astype(o_ref.dtype)

    return kernel


def _make_dwconv_last_kernel(K):
    """Depthwise 1-D cross-correlation along the last axis, 'same' zero padding."""
    pad = K // 2

    def kernel(x_ref, w_ref, o_ref, wp_ref):
        Cb, H, W = o_ref.shape
        wp_ref[...] = jnp.zeros_like(wp_ref)
        wp_ref[:, :, pad:pad + W] = x_ref[...]
        w = w_ref[...]
        acc = jnp.zeros((Cb, H, W), jnp.float32)
        for k in range(K):
            acc = acc + w[:, :, k:k + 1] * wp_ref[:, :, k:k + W]
        o_ref[...] = acc.astype(o_ref.dtype)

    return kernel


def _make_combine_iso_kernel(K):
    """(x + tails + sep_blur_iso(x)) * inv_norm fused in one pass."""
    pad = K // 2

    def kernel(x_ref, tails_ref, w_ref, inorm_ref, o_ref, hp_ref, wp_ref):
        Cb, H, W = o_ref.shape
        x = x_ref[...]
        hp_ref[...] = jnp.zeros_like(hp_ref)
        hp_ref[:, pad:pad + H, :] = x
        w = w_ref[...]
        t = jnp.zeros((Cb, H, W), jnp.float32)
        for k in range(K):
            t = t + w[:, :, k:k + 1] * hp_ref[:, k:k + H, :]
        wp_ref[...] = jnp.zeros_like(wp_ref)
        wp_ref[:, :, pad:pad + W] = t
        iso = jnp.zeros((Cb, H, W), jnp.float32)
        for k in range(K):
            iso = iso + w[:, :, k:k + 1] * wp_ref[:, :, k:k + W]
        o_ref[...] = ((x + tails_ref[...] + iso) * inorm_ref[...]).astype(o_ref.dtype)

    return kernel


# ----------------------------- wrappers --------------------------------------
def fused_double_separable_blur(x, wg, wm):
    """sep_blur(x, wg) + sep_blur(x, wm); x:(N,H,W), wg/wm:(N,K)."""
    N, H, W = x.shape
    K = int(wg.shape[-1])
    pad = K // 2
    per_chan = 4 * (4 * H * W + (H + 2 * pad) * W + H * (W + 2 * pad))
    Cb = _pick_channel_block(N, per_chan)
    return pl.pallas_call(
        _make_sep_blur2_kernel(K),
        out_shape=jax.ShapeDtypeStruct((N, H, W), x.dtype),
        grid=(N // Cb,),
        in_specs=[
            pl.BlockSpec((Cb, H, W), lambda c: (c, 0, 0)),
            pl.BlockSpec((Cb, 1, K), lambda c: (c, 0, 0)),
            pl.BlockSpec((Cb, 1, K), lambda c: (c, 0, 0)),
        ],
        out_specs=pl.BlockSpec((Cb, H, W), lambda c: (c, 0, 0)),
        scratch_shapes=[
            pltpu.VMEM((Cb, H + 2 * pad, W), jnp.float32),
            pltpu.VMEM((Cb, H, W + 2 * pad), jnp.float32),
        ],
        compiler_params=pltpu.CompilerParams(
            dimension_semantics=("parallel",)),
    )(x, wg.reshape(N, 1, K), wm.reshape(N, 1, K))


def separable_blur(x, w):
    """Single fused separable depthwise blur (conv along H then W)."""
    N, H, W = x.shape
    K = int(w.shape[-1])
    pad = K // 2
    per_chan = 4 * (4 * H * W + (H + 2 * pad) * W + H * (W + 2 * pad))
    Cb = _pick_channel_block(N, per_chan)
    return pl.pallas_call(
        _make_sep_blur1_kernel(K),
        out_shape=jax.ShapeDtypeStruct((N, H, W), x.dtype),
        grid=(N // Cb,),
        in_specs=[
            pl.BlockSpec((Cb, H, W), lambda c: (c, 0, 0)),
            pl.BlockSpec((Cb, 1, K), lambda c: (c, 0, 0)),
        ],
        out_specs=pl.BlockSpec((Cb, H, W), lambda c: (c, 0, 0)),
        scratch_shapes=[
            pltpu.VMEM((Cb, H + 2 * pad, W), jnp.float32),
            pltpu.VMEM((Cb, H, W + 2 * pad), jnp.float32),
        ],
        compiler_params=pltpu.CompilerParams(
            dimension_semantics=("parallel",)),
    )(x, w.reshape(N, 1, K))


def depthwise_conv1d_last(x, w):
    """Per-channel (groups=N) 1-D cross-correlation along the LAST axis,
    zero 'same' padding (nn.Conv1d(N,N,K,groups=N,padding='same'))."""
    N, H, W = x.shape
    K = int(w.shape[-1])
    pad = K // 2
    per_chan = 4 * (4 * H * W + H * (W + 2 * pad))
    Cb = _pick_channel_block(N, per_chan)
    return pl.pallas_call(
        _make_dwconv_last_kernel(K),
        out_shape=jax.ShapeDtypeStruct((N, H, W), x.dtype),
        grid=(N // Cb,),
        in_specs=[
            pl.BlockSpec((Cb, H, W), lambda c: (c, 0, 0)),
            pl.BlockSpec((Cb, 1, K), lambda c: (c, 0, 0)),
        ],
        out_specs=pl.BlockSpec((Cb, H, W), lambda c: (c, 0, 0)),
        scratch_shapes=[pltpu.VMEM((Cb, H, W + 2 * pad), jnp.float32)],
        compiler_params=pltpu.CompilerParams(
            dimension_semantics=("parallel",)),
    )(x, w.reshape(N, 1, K))


def fused_iso_combine(output, tails, w_iso, inv_norm):
    """(output + tails + sep_blur(output, w_iso)) * inv_norm in one pallas_call."""
    N, H, W = output.shape
    K = int(w_iso.shape[-1])
    pad = K // 2
    per_chan = 4 * (6 * H * W + (H + 2 * pad) * W + H * (W + 2 * pad))
    Cb = _pick_channel_block(N, per_chan)
    inorm3 = inv_norm.reshape(N, 1, 1).astype(output.dtype)
    return pl.pallas_call(
        _make_combine_iso_kernel(K),
        out_shape=jax.ShapeDtypeStruct((N, H, W), output.dtype),
        grid=(N // Cb,),
        in_specs=[
            pl.BlockSpec((Cb, H, W), lambda c: (c, 0, 0)),
            pl.BlockSpec((Cb, H, W), lambda c: (c, 0, 0)),
            pl.BlockSpec((Cb, 1, K), lambda c: (c, 0, 0)),
            pl.BlockSpec((Cb, 1, 1), lambda c: (c, 0, 0)),
        ],
        out_specs=pl.BlockSpec((Cb, H, W), lambda c: (c, 0, 0)),
        scratch_shapes=[
            pltpu.VMEM((Cb, H + 2 * pad, W), jnp.float32),
            pltpu.VMEM((Cb, H, W + 2 * pad), jnp.float32),
        ],
        compiler_params=pltpu.CompilerParams(
            dimension_semantics=("parallel",)),
    )(output, tails, w_iso.reshape(N, 1, K), inorm3)


# ----------------------------- rotation glue ---------------------------------
# TODO(synk): pytomography's `rotate` (bilinear in-plane rotation) is a gather /
# resampling op with no clean Pallas-TPU equivalent; kept in plain JAX.
def rotate_bilinear(x, angle_deg):
    """Rotate (N, H, W) by angle_deg (degrees, CCW) in the (H, W) plane about
    the image centre, bilinear interpolation, zero fill outside."""
    N, H, W = x.shape
    theta = jnp.deg2rad(jnp.asarray(angle_deg, jnp.float32))
    cos, sin = jnp.cos(theta), jnp.sin(theta)
    cy, cx = (H - 1) / 2.0, (W - 1) / 2.0
    yy, xx = jnp.meshgrid(jnp.arange(H, dtype=jnp.float32) - cy,
                          jnp.arange(W, dtype=jnp.float32) - cx,
                          indexing="ij")
    src_y = cos * yy + sin * xx + cy
    src_x = -sin * yy + cos * xx + cx
    y0 = jnp.floor(src_y)
    x0 = jnp.floor(src_x)
    wy = src_y - y0
    wx = src_x - x0

    def sample(yi, xi):
        valid = (yi >= 0) & (yi <= H - 1) & (xi >= 0) & (xi <= W - 1)
        yc = jnp.clip(yi, 0, H - 1).astype(jnp.int32)
        xc = jnp.clip(xi, 0, W - 1).astype(jnp.int32)
        vals = x[:, yc, xc]
        return jnp.where(valid[None, :, :], vals, 0.0)

    return (((1 - wy) * (1 - wx))[None] * sample(y0, x0)
            + ((1 - wy) * wx)[None] * sample(y0, x0 + 1)
            + (wy * (1 - wx))[None] * sample(y0 + 1, x0)
            + (wy * wx)[None] * sample(y0 + 1, x0 + 1))


# ----------------------------- PSFNet (JAX/Pallas) ---------------------------
class PSFNetPallas:
    def __init__(self, gaus_amplitude_fit, gaus_sigma_fit,
                 mini_gaus_amplitude_fit, mini_gaus_sigma_fit,
                 bkg_amplitude_fit, bkg_sigma_fit,
                 w_spline_f, iso_spline_f, w_integral, iso_integral,
                 dr0, kernel_size0):
        self.gaus_amplitude_fit = gaus_amplitude_fit
        self.gaus_sigma_fit = gaus_sigma_fit
        self.mini_gaus_amplitude_fit = mini_gaus_amplitude_fit
        self.mini_gaus_sigma_fit = mini_gaus_sigma_fit
        self.bkg_amplitude_fit = bkg_amplitude_fit
        self.bkg_sigma_fit = bkg_sigma_fit
        self.w_spline_f = w_spline_f          # deterministic stand-in for scipy spline
        self.iso_spline_f = iso_spline_f
        self.w_integral = w_integral          # stand-in for spline.integrate(...)
        self.iso_integral = iso_integral
        self.dr0 = dr0
        self.kernel_size0 = kernel_size0
        self.gaus_only = False

    def set_gaus_only(self, b):
        self.gaus_only = b

    def configure(self, distances, dr):
        # TODO(synk): fft=True (FFTConv1d) path not implemented; direct conv only.
        d = np.asarray(distances, np.float64)
        self.distances, self.dr = d, dr
        delta = 1e-11
        gA = dual_exponential(d, *self.gaus_amplitude_fit)
        gS = sqrt_fit(d, *self.gaus_sigma_fit)
        mA = dual_exponential(d, *self.mini_gaus_amplitude_fit)
        mS = sqrt_fit(d, *self.mini_gaus_sigma_fit)
        bA = dual_exponential(d, *self.bkg_amplitude_fit)
        bS = sqrt_fit(d, *self.bkg_sigma_fit)
        ks = np.ceil(bS * self.dr0 / dr * self.kernel_size0).astype(int)
        ks[ks % 2 == 0] += 1
        K = int(ks.max())
        self.kernel_size_max = K

        Iw, Iiso = self.w_integral, self.iso_integral
        Nw = 3 * bA * Iw * bS
        Niso = bA * Iiso * bS
        Ng2 = gA * 2 * np.pi * gS ** 2 * (self.dr0 / dr) ** 2
        Ng2_mini = mA * 2 * np.pi * mS ** 2 * (self.dr0 / dr) ** 2
        norm_np = (Nw + Niso ** 2 + 1) * (Ng2 + Ng2_mini)
        self.normalization_factor = jnp.asarray(norm_np, jnp.float32)
        # exact host-side reciprocal -> in-kernel multiply instead of divide
        self.inv_normalization_factor = jnp.asarray(1.0 / norm_np, jnp.float32)

        # per-channel 1-D kernels, all of (odd) size kernel_size_max
        xg = np.arange(-(K // 2), K // 2 + 1)[None, :] * dr / self.dr0
        self.kern_g = jnp.asarray(
            np.sqrt(gA)[:, None] * np.exp(-xg ** 2 / (2 * gS[:, None] ** 2 + delta)),
            jnp.float32)
        self.kern_mini_g = jnp.asarray(
            np.sqrt(mA)[:, None] * np.exp(-xg ** 2 / (2 * mS[:, None] ** 2 + delta)),
            jnp.float32)
        xb = xg / bS[:, None]
        cw = np.nan_to_num(self.w_spline_f(xb), nan=0.0)
        ciso = np.nan_to_num(self.iso_spline_f(xb), nan=0.0)
        self.kern_w = jnp.asarray(bA[:, None] * dr / self.dr0 * cw, jnp.float32)
        self.kern_iso = jnp.asarray(bA[:, None] * dr / self.dr0 * ciso, jnp.float32)

    def forward(self, inp, norm=True, padding=True):
        # inp: (1, N, H, W)
        output0 = inp[0]                                       # (N, H, W)
        if self.gaus_only:
            output1 = separable_blur(output0, self.kern_g)
            res = output1 * self.inv_normalization_factor[:, None, None]
            return res[None]

        # g + mini_g separable blurs fused into one kernel
        output = fused_double_separable_blur(output0, self.kern_g, self.kern_mini_g)

        # septal-penetration tails: rotate / conv along last axis / rotate back
        pad_size = int((output.shape[0] - output.shape[2]) / 2)
        do_pad = bool(padding) and pad_size > 0
        base = output
        if do_pad:
            base = jnp.pad(output, ((0, 0), (0, 0), (pad_size, pad_size)))
        # i = 0: 0-degree rotation is an exact identity -> apply conv directly
        tails = depthwise_conv1d_last(base, self.kern_w)
        for i in (1, 2):
            angle = 60.0 * i
            temp = rotate_bilinear(base, angle)
            t = depthwise_conv1d_last(temp, self.kern_w)
            tails = tails + rotate_bilinear(t, -angle)
        if do_pad:
            tails = tails[:, :, pad_size:-pad_size]

        if norm:
            out = fused_iso_combine(output, tails, self.kern_iso,
                                    self.inv_normalization_factor)
        else:
            iso = separable_blur(output, self.kern_iso)
            out = output + tails + iso
        return out[None]


# ----------------------------- reference (for sanity checks) -----------------
def _ref_sep_blur_lax(x, w):
    """Separable depthwise blur via lax.conv (conv along H then along W)."""
    N, H, W = x.shape
    K = int(w.shape[-1])
    rhs = w.reshape(N, 1, K)
    lhs = jnp.transpose(x, (2, 0, 1))                  # (W, N, H): conv along H
    y = lax.conv_general_dilated(
        lhs, rhs, (1,), "SAME", dimension_numbers=("NCH", "OIH", "NCH"),
        feature_group_count=N, precision=lax.Precision.HIGHEST)
    y = jnp.transpose(y, (1, 2, 0))                    # (N, H, W)
    lhs2 = jnp.transpose(y, (1, 0, 2))                 # (H, N, W): conv along W
    z = lax.conv_general_dilated(
        lhs2, rhs, (1,), "SAME", dimension_numbers=("NCH", "OIH", "NCH"),
        feature_group_count=N, precision=lax.Precision.HIGHEST)
    return jnp.transpose(z, (1, 0, 2))


# ----------------------------- demo / smoke test -----------------------------
if __name__ == "__main__":
    key = jax.random.PRNGKey(0)
    N, H, W = 8, 16, 16
    distances = np.linspace(1.0, 20.0, N)
    dr, dr0, kernel_size0 = 0.4, 0.5, 3

    # deterministic synthetic "spline" shape functions + their integrals
    def w_spline_f(x):
        return np.exp(-x ** 2) * (np.abs(x) < 3.0)

    def iso_spline_f(x):
        return np.exp(-np.abs(x)) * (np.abs(x) < 3.0)

    Iw = float(np.sqrt(np.pi) * 0.99998)       # ~ integral of exp(-x^2) on [-3, 3]
    Iiso = float(2.0 * (1.0 - np.exp(-3.0)))   # integral of exp(-|x|) on [-3, 3]

    net = PSFNetPallas(
        gaus_amplitude_fit=(0.8, 0.05, 0.3, 0.2),
        gaus_sigma_fit=(0.02, 1.0),
        mini_gaus_amplitude_fit=(0.2, 0.1, 0.1, 0.3),
        mini_gaus_sigma_fit=(0.01, 0.5),
        bkg_amplitude_fit=(0.05, 0.1, 0.02, 0.05),
        bkg_sigma_fit=(0.05, 2.0),
        w_spline_f=w_spline_f, iso_spline_f=iso_spline_f,
        w_integral=Iw, iso_integral=Iiso,
        dr0=dr0, kernel_size0=kernel_size0)
    net.configure(distances, dr)

    x = jax.random.normal(key, (1, N, H, W), jnp.float32)
    x0 = x[0]

    # sanity 1: depthwise conv along last axis vs lax grouped conv
    got = depthwise_conv1d_last(x0, net.kern_w)
    lhs = jnp.transpose(x0, (1, 0, 2))                # (H, N, W): batch, chan, len
    rhs = net.kern_w.reshape(N, 1, net.kernel_size_max)
    ref = lax.conv_general_dilated(
        lhs, rhs, (1,), "SAME", dimension_numbers=("NCH", "OIH", "NCH"),
        feature_group_count=N, precision=lax.Precision.HIGHEST)
    ref = jnp.transpose(ref, (1, 0, 2))
    np.testing.assert_allclose(np.asarray(got), np.asarray(ref),
                               rtol=2e-4, atol=1e-5)

    # sanity 2: fused double separable blur (in-kernel padding, fused H/W passes)
    got2 = fused_double_sep = fused_double_separable_blur(
        x0, net.kern_g, net.kern_mini_g)
    ref2 = _ref_sep_blur_lax(x0, net.kern_g) + _ref_sep_blur_lax(x0, net.kern_mini_g)
    np.testing.assert_allclose(np.asarray(got2), np.asarray(ref2),
                               rtol=2e-4, atol=1e-5)

    # sanity 3: single separable blur kernel (used by iso / gaus_only paths)
    got3 = separable_blur(x0, net.kern_iso)
    ref3 = _ref_sep_blur_lax(x0, net.kern_iso)
    np.testing.assert_allclose(np.asarray(got3), np.asarray(ref3),
                               rtol=2e-4, atol=1e-5)

    # full forward
    out = net.forward(x)
    out = jax.block_until_ready(out)
    assert out.shape == (1, N, H, W)
    assert np.all(np.isfinite(np.asarray(out)))

    # gaus_only branch
    net.set_gaus_only(True)
    out_g = jax.block_until_ready(net.forward(x))
    assert out_g.shape == (1, N, H, W)
    assert np.all(np.isfinite(np.asarray(out_g)))
    net.set_gaus_only(False)

    print("KERNEL_OK")
</pallas_src>

<mosaic_0001>
module attributes {stable_mosaic.version = 11 : i64} {
  func.func @kernel(%arg0: i32, %arg1: memref<8x16x16xf32, #tpu.memory_space<vmem>>, %arg2: memref<8x1x13xf32, #tpu.memory_space<vmem>>, %arg3: memref<8x16x16xf32, #tpu.memory_space<vmem>>, %arg4: memref<8x16x28xf32, #tpu.memory_space<vmem>>) attributes {dimension_semantics = [#tpu.dimension_semantics<parallel>], iteration_bounds = array<i64: 1>, scalar_prefetch = 0 : i64, scratch_operands = 1 : i64, tpu.core_type = #tpu.core_type<tc>, window_params = [{transform_indices = @transform_0, window_bounds = array<i64: 8, 16, 16>}, {transform_indices = @transform_1, window_bounds = array<i64: 8, 1, 13>}, {transform_indices = @transform_2, window_bounds = array<i64: 8, 16, 16>}]} {
    %cst = arith.constant 0.000000e+00 : f32
    %0 = vector.broadcast %cst : f32 to vector<8x16x28xf32>
    %c0 = arith.constant 0 : index
    %c0_0 = arith.constant 0 : index
    %c0_1 = arith.constant 0 : index
    %1 = vector.load %arg4[%c0, %c0_0, %c0_1] : memref<8x16x28xf32, #tpu.memory_space<vmem>>, vector<8x16x28xf32>
    tpu.vector_store %arg4[%c0, %c0_0, %c0_1], %0 {strides = array<i32>} : memref<8x16x28xf32, #tpu.memory_space<vmem>>, vector<8x16x28xf32>,
    %c0_2 = arith.constant 0 : index
    %c0_3 = arith.constant 0 : index
    %c0_4 = arith.constant 0 : index
    %2 = vector.load %arg1[%c0_2, %c0_3, %c0_4] : memref<8x16x16xf32, #tpu.memory_space<vmem>>, vector<8x16x16xf32>
    %c0_5 = arith.constant 0 : index
    %c0_6 = arith.constant 0 : index
    %c6 = arith.constant 6 : index
    %3 = vector.load %arg4[%c0_5, %c0_6, %c6] : memref<8x16x28xf32, #tpu.memory_space<vmem>>, vector<8x16x16xf32>
    tpu.vector_store %arg4[%c0_5, %c0_6, %c6], %2 {strides = array<i32>} : memref<8x16x28xf32, #tpu.memory_space<vmem>>, vector<8x16x16xf32>,
    %c0_7 = arith.constant 0 : index
    %c0_8 = arith.constant 0 : index
    %c0_9 = arith.constant 0 : index
    %4 = vector.load %arg2[%c0_7, %c0_8, %c0_9] : memref<8x1x13xf32, #tpu.memory_space<vmem>>, vector<8x1x13xf32>
    %cst_10 = arith.constant 0.000000e+00 : f32
    %5 = vector.broadcast %cst_10 : f32 to vector<8x16x16xf32>
    %6 = vector.extract_strided_slice %4 {offsets = [0, 0, 0], sizes = [8, 1, 1], strides = [1, 1, 1]} : vector<8x1x13xf32> to vector<8x1x1xf32>
    %c0_11 = arith.constant 0 : index
    %c0_12 = arith.constant 0 : index
    %c0_13 = arith.constant 0 : index
    %7 = vector.load %arg4[%c0_11, %c0_12, %c0_13] : memref<8x16x28xf32, #tpu.memory_space<vmem>>, vector<8x16x16xf32>
    %8 = vector.broadcast %6 : vector<8x1x1xf32> to vector<8x16x16xf32>
    %9 = arith.mulf %8, %7 : vector<8x16x16xf32>
    %10 = arith.addf %5, %9 : vector<8x16x16xf32>
    %11 = vector.extract_strided_slice %4 {offsets = [0, 0, 1], sizes = [8, 1, 1], strides = [1, 1, 1]} : vector<8x1x13xf32> to vector<8x1x1xf32>
    %c0_14 = arith.constant 0 : index
    %c0_15 = arith.constant 0 : index
    %c1 = arith.constant 1 : index
    %12 = vector.load %arg4[%c0_14, %c0_15, %c1] : memref<8x16x28xf32, #tpu.memory_space<vmem>>, vector<8x16x16xf32>
    %13 = vector.broadcast %11 : vector<8x1x1xf32> to vector<8x16x16xf32>
    %14 = arith.mulf %13, %12 : vector<8x16x16xf32>
    %15 = arith.addf %10, %14 : vector<8x16x16xf32>
    %16 = vector.extract_strided_slice %4 {offsets = [0, 0, 2], sizes = [8, 1, 1], strides = [1, 1, 1]} : vector<8x1x13xf32> to vector<8x1x1xf32>
    %c0_16 = arith.constant 0 : index
    %c0_17 = arith.constant 0 : index
    %c2 = arith.constant 2 : index
    %17 = vector.load %arg4[%c0_16, %c0_17, %c2] : memref<8x16x28xf32, #tpu.memory_space<vmem>>, vector<8x16x16xf32>
    %18 = vector.broadcast %16 : vector<8x1x1xf32> to vector<8x16x16xf32>
    %19 = arith.mulf %18, %17 : vector<8x16x16xf32>
    %20 = arith.addf %15, %19 : vector<8x16x16xf32>
    %21 = vector.extract_strided_slice %4 {offsets = [0, 0, 3], sizes = [8, 1, 1], strides = [1, 1, 1]} : vector<8x1x13xf32> to vector<8x1x1xf32>
    %c0_18 = arith.constant 0 : index
    %c0_19 = arith.constant 0 : index
    %c3 = arith.constant 3 : index
    %22 = vector.load %arg4[%c0_18, %c0_19, %c3] : memref<8x16x28xf32, #tpu.memory_space<vmem>>, vector<8x16x16xf32>
    %23 = vector.broadcast %21 : vector<8x1x1xf32> to vector<8x16x16xf32>
    %24 = arith.mulf %23, %22 : vector<8x16x16xf32>
    %25 = arith.addf %20, %24 : vector<8x16x16xf32>
    %26 = vector.extract_strided_slice %4 {offsets = [0, 0, 4], sizes = [8, 1, 1], strides = [1, 1, 1]} : vector<8x1x13xf32> to vector<8x1x1xf32>
    %c0_20 = arith.constant 0 : index
    %c0_21 = arith.constant 0 : index
    %c4 = arith.constant 4 : index
    %27 = vector.load %arg4[%c0_20, %c0_21, %c4] : memref<8x16x28xf32, #tpu.memory_space<vmem>>, vector<8x16x16xf32>
    %28 = vector.broadcast %26 : vector<8x1x1xf32> to vector<8x16x16xf32>
    %29 = arith.mulf %28, %27 : vector<8x16x16xf32>
    %30 = arith.addf %25, %29 : vector<8x16x16xf32>
    %31 = vector.extract_strided_slice %4 {offsets = [0, 0, 5], sizes = [8, 1, 1], strides = [1, 1, 1]} : vector<8x1x13xf32> to vector<8x1x1xf32>
    %c0_22 = arith.constant 0 : index
    %c0_23 = arith.constant 0 : index
    %c5 = arith.constant 5 : index
    %32 = vector.load %arg4[%c0_22, %c0_23, %c5] : memref<8x16x28xf32, #tpu.memory_space<vmem>>, vector<8x16x16xf32>
    %33 = vector.broadcast %31 : vector<8x1x1xf32> to vector<8x16x16xf32>
    %34 = arith.mulf %33, %32 : vector<8x16x16xf32>
    %35 = arith.addf %30, %34 : vector<8x16x16xf32>
    %36 = vector.extract_strided_slice %4 {offsets = [0, 0, 6], sizes = [8, 1, 1], strides = [1, 1, 1]} : vector<8x1x13xf32> to vector<8x1x1xf32>
    %c0_24 = arith.constant 0 : index
    %c0_25 = arith.constant 0 : index
    %c6_26 = arith.constant 6 : index
    %37 = vector.load %arg4[%c0_24, %c0_25, %c6_26] : memref<8x16x28xf32, #tpu.memory_space<vmem>>, vector<8x16x16xf32>
    %38 = vector.broadcast %36 : vector<8x1x1xf32> to vector<8x16x16xf32>
    %39 = arith.mulf %38, %37 : vector<8x16x16xf32>
    %40 = arith.addf %35, %39 : vector<8x16x16xf32>
    %41 = vector.extract_strided_slice %4 {offsets = [0, 0, 7], sizes = [8, 1, 1], strides = [1, 1, 1]} : vector<8x1x13xf32> to vector<8x1x1xf32>
    %c0_27 = arith.constant 0 : index
    %c0_28 = arith.constant 0 : index
    %c7 = arith.constant 7 : index
    %42 = vector.load %arg4[%c0_27, %c0_28, %c7] : memref<8x16x28xf32, #tpu.memory_space<vmem>>, vector<8x16x16xf32>
    %43 = vector.broadcast %41 : vector<8x1x1xf32> to vector<8x16x16xf32>
    %44 = arith.mulf %43, %42 : vector<8x16x16xf32>
    %45 = arith.addf %40, %44 : vector<8x16x16xf32>
    %46 = vector.extract_strided_slice %4 {offsets = [0, 0, 8], sizes = [8, 1, 1], strides = [1, 1, 1]} : vector<8x1x13xf32> to vector<8x1x1xf32>
    %c0_29 = arith.constant 0 : index
    %c0_30 = arith.constant 0 : index
    %c8 = arith.constant 8 : index
    %47 = vector.load %arg4[%c0_29, %c0_30, %c8] : memref<8x16x28xf32, #tpu.memory_space<vmem>>, vector<8x16x16xf32>
    %48 = vector.broadcast %46 : vector<8x1x1xf32> to vector<8x16x16xf32>
    %49 = arith.mulf %48, %47 : vector<8x16x16xf32>
    %50 = arith.addf %45, %49 : vector<8x16x16xf32>
    %51 = vector.extract_strided_slice %4 {offsets = [0, 0, 9], sizes = [8, 1, 1], strides = [1, 1, 1]} : vector<8x1x13xf32> to vector<8x1x1xf32>
    %c0_31 = arith.constant 0 : index
    %c0_32 = arith.constant 0 : index
    %c9 = arith.constant 9 : index
    %52 = vector.load %arg4[%c0_31, %c0_32, %c9] : memref<8x16x28xf32, #tpu.memory_space<vmem>>, vector<8x16x16xf32>
    %53 = vector.broadcast %51 : vector<8x1x1xf32> to vector<8x16x16xf32>
    %54 = arith.mulf %53, %52 : vector<8x16x16xf32>
    %55 = arith.addf %50, %54 : vector<8x16x16xf32>
    %56 = vector.extract_strided_slice %4 {offsets = [0, 0, 10], sizes = [8, 1, 1], strides = [1, 1, 1]} : vector<8x1x13xf32> to vector<8x1x1xf32>
    %c0_33 = arith.constant 0 : index
    %c0_34 = arith.constant 0 : index
    %c10 = arith.constant 10 : index
    %57 = vector.load %arg4[%c0_33, %c0_34, %c10] : memref<8x16x28xf32, #tpu.memory_space<vmem>>, vector<8x16x16xf32>
    %58 = vector.broadcast %56 : vector<8x1x1xf32> to vector<8x16x16xf32>
    %59 = arith.mulf %58, %57 : vector<8x16x16xf32>
    %60 = arith.addf %55, %59 : vector<8x16x16xf32>
    %61 = vector.extract_strided_slice %4 {offsets = [0, 0, 11], sizes = [8, 1, 1], strides = [1, 1, 1]} : vector<8x1x13xf32> to vector<8x1x1xf32>
    %c0_35 = arith.constant 0 : index
    %c0_36 = arith.constant 0 : index
    %c11 = arith.constant 11 : index
    %62 = vector.load %arg4[%c0_35, %c0_36, %c11] : memref<8x16x28xf32, #tpu.memory_space<vmem>>, vector<8x16x16xf32>
    %63 = vector.broadcast %61 : vector<8x1x1xf32> to vector<8x16x16xf32>
    %64 = arith.mulf %63, %62 : vector<8x16x16xf32>
    %65 = arith.addf %60, %64 : vector<8x16x16xf32>
    %66 = vector.extract_strided_slice %4 {offsets = [0, 0, 12], sizes = [8, 1, 1], strides = [1, 1, 1]} : vector<8x1x13xf32> to vector<8x1x1xf32>
    %c0_37 = arith.constant 0 : index
    %c0_38 = arith.constant 0 : index
    %c12 = arith.constant 12 : index
    %67 = vector.load %arg4[%c0_37, %c0_38, %c12] : memref<8x16x28xf32, #tpu.memory_space<vmem>>, vector<8x16x16xf32>
    %68 = vector.broadcast %66 : vector<8x1x1xf32> to vector<8x16x16xf32>
    %69 = arith.mulf %68, %67 : vector<8x16x16xf32>
    %70 = arith.addf %65, %69 : vector<8x16x16xf32>
    %c0_39 = arith.constant 0 : index
    %c0_40 = arith.constant 0 : index
    %c0_41 = arith.constant 0 : index
    %71 = vector.load %arg3[%c0_39, %c0_40, %c0_41] : memref<8x16x16xf32, #tpu.memory_space<vmem>>, vector<8x16x16xf32>
    tpu.vector_store %arg3[%c0_39, %c0_40, %c0_41], %70 {strides = array<i32>} : memref<8x16x16xf32, #tpu.memory_space<vmem>>, vector<8x16x16xf32>,
    return
  }
  func.func @transform_0(%arg0: i32) -> (i32, i32, i32) {
    %c0_i32 = arith.constant 0 : i32
    %c0_i32_0 = arith.constant 0 : i32
    %c0_i32_1 = arith.constant 0 : i32
    return %arg0, %c0_i32, %c0_i32_0 : i32, i32, i32
  }
  func.func @transform_1(%arg0: i32) -> (i32, i32, i32) {
    %c0_i32 = arith.constant 0 : i32
    %c0_i32_0 = arith.constant 0 : i32
    %c0_i32_1 = arith.constant 0 : i32
    return %arg0, %c0_i32, %c0_i32_0 : i32, i32, i32
  }
  func.func @transform_2(%arg0: i32) -> (i32, i32, i32) {
    %c0_i32 = arith.constant 0 : i32
    %c0_i32_0 = arith.constant 0 : i32
    %c0_i32_1 = arith.constant 0 : i32
    return %arg0, %c0_i32, %c0_i32_0 : i32, i32, i32
  }
}

</mosaic_0001>

<llo_original>
// kernel: tpu_custom_call.1
$region0: #{tpu_custom_call.1}
  #allocation0 [shape = 'u32[]', space=smem, size = 0x4, offset = 0x4, fixed_abs, tag = 'smem constant byte address 0x4 - core index']
  #allocation1 [shape = 'u32[72,128]{1,0:T(1,128)}', space=vmem, size = 0x9000, scoped, tag = 'internal scratch']
  #allocation2 [shape = 'f32[8,16,28]{2,1,0:T(8,128)}', space=vmem, size = 0x10000, scoped, tag = 'scratch operand']
  %s0 = inlined_call_operand.hbm [shape: f32[8,16,16], index: 0, kind: input, shape index: {}]
  %s1 = inlined_call_operand.hbm [shape: f32[8,1,13], index: 1, kind: input, shape index: {}]
  %s2 = inlined_call_operand.hbm [shape: f32[8,16,16], index: 2, kind: output, shape index: {}]
  %s3 = sld [smem:[#allocation0]]
  $region26: #{tpu_custom_call.1} parent=0
    _
  %s5 = ssub.s32 1, %s3
  %s6 = scalar_select 0, %s5, %s3
  $region1: #{tpu_custom_call.1} parent=0
    #allocation3 [shape = 'u8[65536]{0}', space=vmem, size = 0x10000, scoped, tag = 'input window, operand 0, single buffered']
    #allocation4 [shape = 's32[1]{0}', space=sflag, size = 0x4, scoped, tag = 'scoped memory for tpu_custom_call.1']
    #allocation5 [shape = 's32[1]{0}', space=sflag, size = 0x4, scoped, tag = 'scoped memory for tpu_custom_call.1']
    #allocation6 [shape = 'u8[4096]{0}', space=vmem, size = 0x1000, scoped, tag = 'input window, operand 1, single buffered']
    #allocation7 [shape = 's32[1]{0}', space=sflag, size = 0x4, scoped, tag = 'scoped memory for tpu_custom_call.1']
    #allocation8 [shape = 'u8[65536]{0}', space=vmem, size = 0x10000, scoped, tag = 'output window, operand 0, single buffered']
    %7 = vsyncpa [#allocation4], 0
    %8 = vsyncpa [#allocation7], 0
    %9 = vsyncpa [#allocation5], 0
    // Predicated region
    $region2: #{tpu_custom_call.1} parent=1 // pred_check
      _
    $region3: #{tpu_custom_call.1} parent=1 // pred_check_branch
      %11 = sbr.rel (0) target = $region5
    $region4: #{tpu_custom_call.1} parent=1 // pred_region
      %13 = vsyncadd [#allocation4], 0
      %s14 = sshll.u32 %s0, 4
      %s15 = int_to_ptr.hbm [resolvable:$true] %s14
      %s16 = sshll.u32 [#allocation3], 4
      %s17 = int_to_ptr.vmem [resolvable:$true] %s16
      %22 = dma.hbm_to_vmem [thread:$0]  %s15, 2048, %s17, [#allocation4], 128, 128, 8
    $region5: #{tpu_custom_call.1} parent=1 // pred_fallthru
      _
    // Predicated region
    $region6: #{tpu_custom_call.1} parent=1 // pred_check
      _
    $region7: #{tpu_custom_call.1} parent=1 // pred_check_branch
      %24 = sbr.rel (0) target = $region9
    $region8: #{tpu_custom_call.1} parent=1 // pred_region
      %26 = vsyncadd [#allocation7], 0
      %s27 = sshll.u32 %s1, 4
      %s28 = int_to_ptr.hbm [resolvable:$true] %s27
      %s29 = sshll.u32 [#allocation6], 4
      %s30 = int_to_ptr.vmem [resolvable:$true] %s29
      %35 = dma.hbm_to_vmem [thread:$0]  %s28, 128, %s30, [#allocation7], 16, 16, 1
    $region9: #{tpu_custom_call.1} parent=1 // pred_fallthru
      _
    // Predicated region
    $region10: #{tpu_custom_call.1} parent=1 // pred_check
      _
    $region11: #{tpu_custom_call.1} parent=1 // pred_check_branch
      %37 = sbr.rel (0) target = $region13
    $region12: #{tpu_custom_call.1} parent=1 // pred_region
      %39 = dma.done [#allocation4], 2048
    $region13: #{tpu_custom_call.1} parent=1 // pred_fallthru
      _
    // Predicated region
    $region14: #{tpu_custom_call.1} parent=1 // pred_check
      _
    $region15: #{tpu_custom_call.1} parent=1 // pred_check_branch
      %41 = sbr.rel (0) target = $region17
    $region16: #{tpu_custom_call.1} parent=1 // pred_region
      %43 = dma.done [#allocation7], 128
    $region17: #{tpu_custom_call.1} parent=1 // pred_fallthru
      _
    %vm44 = vcmask 228352
    %45 = vst.msk [vmem:[#allocation2] sm:$0xff] %vm44, 0.0
    %46 = vst.msk [vmem:[#allocation2 + $0x8] sm:$0xff] %vm44, 0.0
    %47 = vst.msk [vmem:[#allocation2 + $0x10] sm:$0xff] %vm44, 0.0
    %48 = vst.msk [vmem:[#allocation2 + $0x18] sm:$0xff] %vm44, 0.0
    %49 = vst.msk [vmem:[#allocation2 + $0x20] sm:$0xff] %vm44, 0.0
    %50 = vst.msk [vmem:[#allocation2 + $0x28] sm:$0xff] %vm44, 0.0
    %51 = vst.msk [vmem:[#allocation2 + $0x30] sm:$0xff] %vm44, 0.0
    %52 = vst.msk [vmem:[#allocation2 + $0x38] sm:$0xff] %vm44, 0.0
    %53 = vst.msk [vmem:[#allocation2 + $0x40] sm:$0xff] %vm44, 0.0
    %54 = vst.msk [vmem:[#allocation2 + $0x48] sm:$0xff] %vm44, 0.0
    %55 = vst.msk [vmem:[#allocation2 + $0x50] sm:$0xff] %vm44, 0.0
    %56 = vst.msk [vmem:[#allocation2 + $0x58] sm:$0xff] %vm44, 0.0
    %57 = vst.msk [vmem:[#allocation2 + $0x60] sm:$0xff] %vm44, 0.0
    %58 = vst.msk [vmem:[#allocation2 + $0x68] sm:$0xff] %vm44, 0.0
    %59 = vst.msk [vmem:[#allocation2 + $0x70] sm:$0xff] %vm44, 0.0
    %60 = vst.msk [vmem:[#allocation2 + $0x78] sm:$0xff] %vm44, 0.0
    %v61 = vld [vmem:[#allocation3] sm:$0xff]
    %v62 = vld [vmem:[#allocation3 + $0x8] sm:$0xff]
    %v63 = vld [vmem:[#allocation3 + $0x10] sm:$0xff]
    %v64 = vld [vmem:[#allocation3 + $0x18] sm:$0xff]
    %v65 = vld [vmem:[#allocation3 + $0x20] sm:$0xff]
    %v66 = vld [vmem:[#allocation3 + $0x28] sm:$0xff]
    %v67 = vld [vmem:[#allocation3 + $0x30] sm:$0xff]
    %v68 = vld [vmem:[#allocation3 + $0x38] sm:$0xff]
    %v69 = vld [vmem:[#allocation3 + $0x40] sm:$0xff]
    %v70 = vld [vmem:[#allocation3 + $0x48] sm:$0xff]
    %v71 = vld [vmem:[#allocation3 + $0x50] sm:$0xff]
    %v72 = vld [vmem:[#allocation3 + $0x58] sm:$0xff]
    %v73 = vld [vmem:[#allocation3 + $0x60] sm:$0xff]
    %v74 = vld [vmem:[#allocation3 + $0x68] sm:$0xff]
    %v75 = vld [vmem:[#allocation3 + $0x70] sm:$0xff]
    %v76 = vld [vmem:[#allocation3 + $0x78] sm:$0xff]
    %93 = vrot.lane.b32.xlu0 %v61, 6
    %v94 = vpop.permute.xlu0 %93
    %95 = vrot.lane.b32.xlu0 %v62, 6
    %v96 = vpop.permute.xlu0 %95
    %97 = vrot.lane.b32.xlu0 %v63, 6
    %v98 = vpop.permute.xlu0 %97
    %99 = vrot.lane.b32.xlu0 %v64, 6
    %v100 = vpop.permute.xlu0 %99
    %101 = vrot.lane.b32.xlu0 %v65, 6
    %v102 = vpop.permute.xlu0 %101
    %103 = vrot.lane.b32.xlu0 %v66, 6
    %v104 = vpop.permute.xlu0 %103
    %105 = vrot.lane.b32.xlu0 %v67, 6
    %v106 = vpop.permute.xlu0 %105
    %107 = vrot.lane.b32.xlu0 %v68, 6
    %v108 = vpop.permute.xlu0 %107
    %109 = vrot.lane.b32.xlu0 %v69, 6
    %v110 = vpop.permute.xlu0 %109
    %111 = vrot.lane.b32.xlu0 %v70, 6
    %v112 = vpop.permute.xlu0 %111
    %113 = vrot.lane.b32.xlu0 %v71, 6
    %v114 = vpop.permute.xlu0 %113
    %115 = vrot.lane.b32.xlu0 %v72, 6
    %v116 = vpop.permute.xlu0 %115
    %117 = vrot.lane.b32.xlu0 %v73, 6
    %v118 = vpop.permute.xlu0 %117
    %119 = vrot.lane.b32.xlu0 %v74, 6
    %v120 = vpop.permute.xlu0 %119
    %121 = vrot.lane.b32.xlu0 %v75, 6
    %v122 = vpop.permute.xlu0 %121
    %123 = vrot.lane.b32.xlu0 %v76, 6
    %v124 = vpop.permute.xlu0 %123
    %vm141 = vcmask 179248
    %142 = vst.msk [vmem:[#allocation2] sm:$0xff] %vm141, %v94
    %143 = vst.msk [vmem:[#allocation2 + $0x8] sm:$0xff] %vm141, %v96
    %144 = vst.msk [vmem:[#allocation2 + $0x10] sm:$0xff] %vm141, %v98
    %145 = vst.msk [vmem:[#allocation2 + $0x18] sm:$0xff] %vm141, %v100
    %146 = vst.msk [vmem:[#allocation2 + $0x20] sm:$0xff] %vm141, %v102
    %147 = vst.msk [vmem:[#allocation2 + $0x28] sm:$0xff] %vm141, %v104
    %148 = vst.msk [vmem:[#allocation2 + $0x30] sm:$0xff] %vm141, %v106
    %149 = vst.msk [vmem:[#allocation2 + $0x38] sm:$0xff] %vm141, %v108
    %150 = vst.msk [vmem:[#allocation2 + $0x40] sm:$0xff] %vm141, %v110
    %151 = vst.msk [vmem:[#allocation2 + $0x48] sm:$0xff] %vm141, %v112
    %152 = vst.msk [vmem:[#allocation2 + $0x50] sm:$0xff] %vm141, %v114
    %153 = vst.msk [vmem:[#allocation2 + $0x58] sm:$0xff] %vm141, %v116
    %154 = vst.msk [vmem:[#allocation2 + $0x60] sm:$0xff] %vm141, %v118
    %155 = vst.msk [vmem:[#allocation2 + $0x68] sm:$0xff] %vm141, %v120
    %156 = vst.msk [vmem:[#allocation2 + $0x70] sm:$0xff] %vm141, %v122
    %157 = vst.msk [vmem:[#allocation2 + $0x78] sm:$0xff] %vm141, %v124
    %v158 = vld [vmem:[#allocation6] sm:$0x1]
    %v159 = vld [vmem:[#allocation6 + $0x1] sm:$0x1]
    %v160 = vld [vmem:[#allocation6 + $0x2] sm:$0x1]
    %v161 = vld [vmem:[#allocation6 + $0x3] sm:$0x1]
    %v162 = vld [vmem:[#allocation6 + $0x4] sm:$0x1]
    %v163 = vld [vmem:[#allocation6 + $0x5] sm:$0x1]
    %v164 = vld [vmem:[#allocation6 + $0x6] sm:$0x1]
    %v165 = vld [vmem:[#allocation6 + $0x7] sm:$0x1]
    %v166 = vld [vmem:[#allocation2] sm:$0xff]
    %v167 = vld [vmem:[#allocation2 + $0x8] sm:$0xff]
    %v168 = vld [vmem:[#allocation2 + $0x10] sm:$0xff]
    %v169 = vld [vmem:[#allocation2 + $0x18] sm:$0xff]
    %v170 = vld [vmem:[#allocation2 + $0x20] sm:$0xff]
    %v171 = vld [vmem:[#allocation2 + $0x28] sm:$0xff]
    %v172 = vld [vmem:[#allocation2 + $0x30] sm:$0xff]
    %v173 = vld [vmem:[#allocation2 + $0x38] sm:$0xff]
    %v174 = vld [vmem:[#allocation2 + $0x40] sm:$0xff]
    %v175 = vld [vmem:[#allocation2 + $0x48] sm:$0xff]
    %v176 = vld [vmem:[#allocation2 + $0x50] sm:$0xff]
    %v177 = vld [vmem:[#allocation2 + $0x58] sm:$0xff]
    %v178 = vld [vmem:[#allocation2 + $0x60] sm:$0xff]
    %v179 = vld [vmem:[#allocation2 + $0x68] sm:$0xff]
    %v180 = vld [vmem:[#allocation2 + $0x70] sm:$0xff]
    %v181 = vld [vmem:[#allocation2 + $0x78] sm:$0xff]
    %v190 = vperm.slane %v158, 0
    %v191 = vperm.slane %v159, 0
    %v192 = vperm.slane %v160, 0
    %v193 = vperm.slane %v161, 0
    %v194 = vperm.slane %v162, 0
    %v195 = vperm.slane %v163, 0
    %v196 = vperm.slane %v164, 0
    %v197 = vperm.slane %v165, 0
    %198 = vset.pattern.permute.xlu0 0
    %199 = vperm.xlu0 %198, %v190
    %v200 = vpop.permute.xlu0 %199
    %202 = vset.pattern.permute.xlu0 0
    %203 = vperm.xlu0 %202, %v191
    %v204 = vpop.permute.xlu0 %203
    %206 = vset.pattern.permute.xlu0 0
    %207 = vperm.xlu0 %206, %v192
    %v208 = vpop.permute.xlu0 %207
    %210 = vset.pattern.permute.xlu0 0
    %211 = vperm.xlu0 %210, %v193
    %v212 = vpop.permute.xlu0 %211
    %214 = vset.pattern.permute.xlu0 0
    %215 = vperm.xlu0 %214, %v194
    %v216 = vpop.permute.xlu0 %215
    %218 = vset.pattern.permute.xlu0 0
    %219 = vperm.xlu0 %218, %v195
    %v220 = vpop.permute.xlu0 %219
    %222 = vset.pattern.permute.xlu0 0
    %223 = vperm.xlu0 %222, %v196
    %v224 = vpop.permute.xlu0 %223
    %226 = vset.pattern.permute.xlu0 0
    %227 = vperm.xlu0 %226, %v197
    %v228 = vpop.permute.xlu0 %227
    %v230 = vmul.f32 %v200, %v166
    %v231 = vmul.f32 %v200, %v167
    %v232 = vmul.f32 %v204, %v168
    %v233 = vmul.f32 %v204, %v169
    %v234 = vmul.f32 %v208, %v170
    %v235 = vmul.f32 %v208, %v171
    %v236 = vmul.f32 %v212, %v172
    %v237 = vmul.f32 %v212, %v173
    %v238 = vmul.f32 %v216, %v174
    %v239 = vmul.f32 %v216, %v175
    %v240 = vmul.f32 %v220, %v176
    %v241 = vmul.f32 %v220, %v177
    %v242 = vmul.f32 %v224, %v178
    %v243 = vmul.f32 %v224, %v179
    %v244 = vmul.f32 %v228, %v180
    %v245 = vmul.f32 %v228, %v181
    %v246 = vadd.f32 %v230, 0.0
    %v247 = vadd.f32 %v231, 0.0
    %v248 = vadd.f32 %v232, 0.0
    %v249 = vadd.f32 %v233, 0.0
    %v250 = vadd.f32 %v234, 0.0
    %v251 = vadd.f32 %v235, 0.0
    %v252 = vadd.f32 %v236, 0.0
    %v253 = vadd.f32 %v237, 0.0
    %v254 = vadd.f32 %v238, 0.0
    %v255 = vadd.f32 %v239, 0.0
    %v256 = vadd.f32 %v240, 0.0
    %v257 = vadd.f32 %v241, 0.0
    %v258 = vadd.f32 %v242, 0.0
    %v259 = vadd.f32 %v243, 0.0
    %v260 = vadd.f32 %v244, 0.0
    %v261 = vadd.f32 %v245, 0.0
    %262 = vset.pattern.permute.xlu0 1
    %263 = vperm.xlu0 %262, %v190
    %v264 = vpop.permute.xlu0 %263
    %266 = vset.pattern.permute.xlu0 1
    %267 = vperm.xlu0 %266, %v191
    %v268 = vpop.permute.xlu0 %267
    %270 = vset.pattern.permute.xlu0 1
    %271 = vperm.xlu0 %270, %v192
    %v272 = vpop.permute.xlu0 %271
    %274 = vset.pattern.permute.xlu0 1
    %275 = vperm.xlu0 %274, %v193
    %v276 = vpop.permute.xlu0 %275
    %278 = vset.pattern.permute.xlu0 1
    %279 = vperm.xlu0 %278, %v194
    %v280 = vpop.permute.xlu0 %279
    %282 = vset.pattern.permute.xlu0 1
    %283 = vperm.xlu0 %282, %v195
    %v284 = vpop.permute.xlu0 %283
    %286 = vset.pattern.permute.xlu0 1
    %287 = vperm.xlu0 %286, %v196
    %v288 = vpop.permute.xlu0 %287
    %290 = vset.pattern.permute.xlu0 1
    %291 = vperm.xlu0 %290, %v197
    %v292 = vpop.permute.xlu0 %291
    %v294 = vmul.f32 %v264, %v166
    %v295 = vmul.f32 %v264, %v167
    %v296 = vmul.f32 %v268, %v168
    %v297 = vmul.f32 %v268, %v169
    %v298 = vmul.f32 %v272, %v170
    %v299 = vmul.f32 %v272, %v171
    %v300 = vmul.f32 %v276, %v172
    %v301 = vmul.f32 %v276, %v173
    %v302 = vmul.f32 %v280, %v174
    %v303 = vmul.f32 %v280, %v175
    %v304 = vmul.f32 %v284, %v176
    %v305 = vmul.f32 %v284, %v177
    %v306 = vmul.f32 %v288, %v178
    %v307 = vmul.f32 %v288, %v179
    %v308 = vmul.f32 %v292, %v180
    %v309 = vmul.f32 %v292, %v181
    %326 = vrot.lane.b32.xlu0 %v294, 127
    %v327 = vpop.permute.xlu0 %326
    %328 = vrot.lane.b32.xlu0 %v295, 127
    %v329 = vpop.permute.xlu0 %328
    %330 = vrot.lane.b32.xlu0 %v296, 127
    %v331 = vpop.permute.xlu0 %330
    %332 = vrot.lane.b32.xlu0 %v297, 127
    %v333 = vpop.permute.xlu0 %332
    %334 = vrot.lane.b32.xlu0 %v298, 127
    %v335 = vpop.permute.xlu0 %334
    %336 = vrot.lane.b32.xlu0 %v299, 127
    %v337 = vpop.permute.xlu0 %336
    %338 = vrot.lane.b32.xlu0 %v300, 127
    %v339 = vpop.permute.xlu0 %338
    %340 = vrot.lane.b32.xlu0 %v301, 127
    %v341 = vpop.permute.xlu0 %340
    %342 = vrot.lane.b32.xlu0 %v302, 127
    %v343 = vpop.permute.xlu0 %342
    %344 = vrot.lane.b32.xlu0 %v303, 127
    %v345 = vpop.permute.xlu0 %344
    %346 = vrot.lane.b32.xlu0 %v304, 127
    %v347 = vpop.permute.xlu0 %346
    %348 = vrot.lane.b32.xlu0 %v305, 127
    %v349 = vpop.permute.xlu0 %348
    %350 = vrot.lane.b32.xlu0 %v306, 127
    %v351 = vpop.permute.xlu0 %350
    %352 = vrot.lane.b32.xlu0 %v307, 127
    %v353 = vpop.permute.xlu0 %352
    %354 = vrot.lane.b32.xlu0 %v308, 127
    %v355 = vpop.permute.xlu0 %354
    %356 = vrot.lane.b32.xlu0 %v309, 127
    %v357 = vpop.permute.xlu0 %356
    %v374 = vadd.f32 %v246, %v327
    %v375 = vadd.f32 %v247, %v329
    %v376 = vadd.f32 %v248, %v331
    %v377 = vadd.f32 %v249, %v333
    %v378 = vadd.f32 %v250, %v335
    %v379 = vadd.f32 %v251, %v337
    %v380 = vadd.f32 %v252, %v339
    %v381 = vadd.f32 %v253, %v341
    %v382 = vadd.f32 %v254, %v343
    %v383 = vadd.f32 %v255, %v345
    %v384 = vadd.f32 %v256, %v347
    %v385 = vadd.f32 %v257, %v349
    %v386 = vadd.f32 %v258, %v351
    %v387 = vadd.f32 %v259, %v353
    %v388 = vadd.f32 %v260, %v355
    %v389 = vadd.f32 %v261, %v357
    %390 = vset.pattern.permute.xlu0 2
    %391 = vperm.xlu0 %390, %v190
    %v392 = vpop.permute.xlu0 %391
    %394 = vset.pattern.permute.xlu0 2
    %395 = vperm.xlu0 %394, %v191
    %v396 = vpop.permute.xlu0 %395
    %398 = vset.pattern.permute.xlu0 2
    %399 = vperm.xlu0 %398, %v192
    %v400 = vpop.permute.xlu0 %399
    %402 = vset.pattern.permute.xlu0 2
    %403 = vperm.xlu0 %402, %v193
    %v404 = vpop.permute.xlu0 %403
    %406 = vset.pattern.permute.xlu0 2
    %407 = vperm.xlu0 %406, %v194
    %v408 = vpop.permute.xlu0 %407
    %410 = vset.pattern.permute.xlu0 2
    %411 = vperm.xlu0 %410, %v195
    %v412 = vpop.permute.xlu0 %411
    %414 = vset.pattern.permute.xlu0 2
    %415 = vperm.xlu0 %414, %v196
    %v416 = vpop.permute.xlu0 %415
    %418 = vset.pattern.permute.xlu0 2
    %419 = vperm.xlu0 %418, %v197
    %v420 = vpop.permute.xlu0 %419
    %v422 = vmul.f32 %v392, %v166
    %v423 = vmul.f32 %v392, %v167
    %v424 = vmul.f32 %v396, %v168
    %v425 = vmul.f32 %v396, %v169
    %v426 = vmul.f32 %v400, %v170
    %v427 = vmul.f32 %v400, %v171
    %v428 = vmul.f32 %v404, %v172
    %v429 = vmul.f32 %v404, %v173
    %v430 = vmul.f32 %v408, %v174
    %v431 = vmul.f32 %v408, %v175
    %v432 = vmul.f32 %v412, %v176
    %v433 = vmul.f32 %v412, %v177
    %v434 = vmul.f32 %v416, %v178
    %v435 = vmul.f32 %v416, %v179
    %v436 = vmul.f32 %v420, %v180
    %v437 = vmul.f32 %v420, %v181
    %454 = vrot.lane.b32.xlu0 %v422, 126
    %v455 = vpop.permute.xlu0 %454
    %456 = vrot.lane.b32.xlu0 %v423, 126
    %v457 = vpop.permute.xlu0 %456
    %458 = vrot.lane.b32.xlu0 %v424, 126
    %v459 = vpop.permute.xlu0 %458
    %460 = vrot.lane.b32.xlu0 %v425, 126
    %v461 = vpop.permute.xlu0 %460
    %462 = vrot.lane.b32.xlu0 %v426, 126
    %v463 = vpop.permute.xlu0 %462
    %464 = vrot.lane.b32.xlu0 %v427, 126
    %v465 = vpop.permute.xlu0 %464
    %466 = vrot.lane.b32.xlu0 %v428, 126
    %v467 = vpop.permute.xlu0 %466
    %468 = vrot.lane.b32.xlu0 %v429, 126
    %v469 = vpop.permute.xlu0 %468
    %470 = vrot.lane.b32.xlu0 %v430, 126
    %v471 = vpop.permute.xlu0 %470
    %472 = vrot.lane.b32.xlu0 %v431, 126
    %v473 = vpop.permute.xlu0 %472
    %474 = vrot.lane.b32.xlu0 %v432, 126
    %v475 = vpop.permute.xlu0 %474
    %476 = vrot.lane.b32.xlu0 %v433, 126
    %v477 = vpop.permute.xlu0 %476
    %478 = vrot.lane.b32.xlu0 %v434, 126
    %v479 = vpop.permute.xlu0 %478
    %480 = vrot.lane.b32.xlu0 %v435, 126
    %v481 = vpop.permute.xlu0 %480
    %482 = vrot.lane.b32.xlu0 %v436, 126
    %v483 = vpop.permute.xlu0 %482
    %484 = vrot.lane.b32.xlu0 %v437, 126
    %v485 = vpop.permute.xlu0 %484
    %v502 = vadd.f32 %v374, %v455
    %v503 = vadd.f32 %v375, %v457
    %v504 = vadd.f32 %v376, %v459
    %v505 = vadd.f32 %v377, %v461
    %v506 = vadd.f32 %v378, %v463
    %v507 = vadd.f32 %v379, %v465
    %v508 = vadd.f32 %v380, %v467
    %v509 = vadd.f32 %v381, %v469
    %v510 = vadd.f32 %v382, %v471
    %v511 = vadd.f32 %v383, %v473
    %v512 = vadd.f32 %v384, %v475
    %v513 = vadd.f32 %v385, %v477
    %v514 = vadd.f32 %v386, %v479
    %v515 = vadd.f32 %v387, %v481
    %v516 = vadd.f32 %v388, %v483
    %v517 = vadd.f32 %v389, %v485
    %518 = vset.pattern.permute.xlu0 3
    %519 = vperm.xlu0 %518, %v190
    %v520 = vpop.permute.xlu0 %519
    %522 = vset.pattern.permute.xlu0 3
    %523 = vperm.xlu0 %522, %v191
    %v524 = vpop.permute.xlu0 %523
    %526 = vset.pattern.permute.xlu0 3
    %527 = vperm.xlu0 %526, %v192
    %v528 = vpop.permute.xlu0 %527
    %530 = vset.pattern.permute.xlu0 3
    %531 = vperm.xlu0 %530, %v193
    %v532 = vpop.permute.xlu0 %531
    %534 = vset.pattern.permute.xlu0 3
    %535 = vperm.xlu0 %534, %v194
    %v536 = vpop.permute.xlu0 %535
    %538 = vset.pattern.permute.xlu0 3
    %539 = vperm.xlu0 %538, %v195
    %v540 = vpop.permute.xlu0 %539
    %542 = vset.pattern.permute.xlu0 3
    %543 = vperm.xlu0 %542, %v196
    %v544 = vpop.permute.xlu0 %543
    %546 = vset.pattern.permute.xlu0 3
    %547 = vperm.xlu0 %546, %v197
    %v548 = vpop.permute.xlu0 %547
    %v550 = vmul.f32 %v520, %v166
    %v551 = vmul.f32 %v520, %v167
    %v552 = vmul.f32 %v524, %v168
    %v553 = vmul.f32 %v524, %v169
    %v554 = vmul.f32 %v528, %v170
    %v555 = vmul.f32 %v528, %v171
    %v556 = vmul.f32 %v532, %v172
    %v557 = vmul.f32 %v532, %v173
    %v558 = vmul.f32 %v536, %v174
    %v559 = vmul.f32 %v536, %v175
    %v560 = vmul.f32 %v540, %v176
    %v561 = vmul.f32 %v540, %v177
    %v562 = vmul.f32 %v544, %v178
    %v563 = vmul.f32 %v544, %v179
    %v564 = vmul.f32 %v548, %v180
    %v565 = vmul.f32 %v548, %v181
    %582 = vrot.lane.b32.xlu0 %v550, 125
    %v583 = vpop.permute.xlu0 %582
    %584 = vrot.lane.b32.xlu0 %v551, 125
    %v585 = vpop.permute.xlu0 %584
    %586 = vrot.lane.b32.xlu0 %v552, 125
    %v587 = vpop.permute.xlu0 %586
    %588 = vrot.lane.b32.xlu0 %v553, 125
    %v589 = vpop.permute.xlu0 %588
    %590 = vrot.lane.b32.xlu0 %v554, 125
    %v591 = vpop.permute.xlu0 %590
    %592 = vrot.lane.b32.xlu0 %v555, 125
    %v593 = vpop.permute.xlu0 %592
    %594 = vrot.lane.b32.xlu0 %v556, 125
    %v595 = vpop.permute.xlu0 %594
    %596 = vrot.lane.b32.xlu0 %v557, 125
    %v597 = vpop.permute.xlu0 %596
    %598 = vrot.lane.b32.xlu0 %v558, 125
    %v599 = vpop.permute.xlu0 %598
    %600 = vrot.lane.b32.xlu0 %v559, 125
    %v601 = vpop.permute.xlu0 %600
    %602 = vrot.lane.b32.xlu0 %v560, 125
    %v603 = vpop.permute.xlu0 %602
    %604 = vrot.lane.b32.xlu0 %v561, 125
    %v605 = vpop.permute.xlu0 %604
    %606 = vrot.lane.b32.xlu0 %v562, 125
    %v607 = vpop.permute.xlu0 %606
    %608 = vrot.lane.b32.xlu0 %v563, 125
    %v609 = vpop.permute.xlu0 %608
    %610 = vrot.lane.b32.xlu0 %v564, 125
    %v611 = vpop.permute.xlu0 %610
    %612 = vrot.lane.b32.xlu0 %v565, 125
    %v613 = vpop.permute.xlu0 %612
    %v630 = vadd.f32 %v502, %v583
    %v631 = vadd.f32 %v503, %v585
    %v632 = vadd.f32 %v504, %v587
    %v633 = vadd.f32 %v505, %v589
    %v634 = vadd.f32 %v506, %v591
    %v635 = vadd.f32 %v507, %v593
    %v636 = vadd.f32 %v508, %v595
    %v637 = vadd.f32 %v509, %v597
    %v638 = vadd.f32 %v510, %v599
    %v639 = vadd.f32 %v511, %v601
    %v640 = vadd.f32 %v512, %v603
    %v641 = vadd.f32 %v513, %v605
    %v642 = vadd.f32 %v514, %v607
    %v643 = vadd.f32 %v515, %v609
    %v644 = vadd.f32 %v516, %v611
    %v645 = vadd.f32 %v517, %v613
    %646 = vset.pattern.permute.xlu0 4
    %647 = vperm.xlu0 %646, %v190
    %v648 = vpop.permute.xlu0 %647
    %650 = vset.pattern.permute.xlu0 4
    %651 = vperm.xlu0 %650, %v191
    %v652 = vpop.permute.xlu0 %651
    %654 = vset.pattern.permute.xlu0 4
    %655 = vperm.xlu0 %654, %v192
    %v656 = vpop.permute.xlu0 %655
    %658 = vset.pattern.permute.xlu0 4
    %659 = vperm.xlu0 %658, %v193
    %v660 = vpop.permute.xlu0 %659
    %662 = vset.pattern.permute.xlu0 4
    %663 = vperm.xlu0 %662, %v194
    %v664 = vpop.permute.xlu0 %663
    %666 = vset.pattern.permute.xlu0 4
    %667 = vperm.xlu0 %666, %v195
    %v668 = vpop.permute.xlu0 %667
    %670 = vset.pattern.permute.xlu0 4
    %671 = vperm.xlu0 %670, %v196
    %v672 = vpop.permute.xlu0 %671
    %674 = vset.pattern.permute.xlu0 4
    %675 = vperm.xlu0 %674, %v197
    %v676 = vpop.permute.xlu0 %675
    %v678 = vmul.f32 %v648, %v166
    %v679 = vmul.f32 %v648, %v167
    %v680 = vmul.f32 %v652, %v168
    %v681 = vmul.f32 %v652, %v169
    %v682 = vmul.f32 %v656, %v170
    %v683 = vmul.f32 %v656, %v171
    %v684 = vmul.f32 %v660, %v172
    %v685 = vmul.f32 %v660, %v173
    %v686 = vmul.f32 %v664, %v174
    %v687 = vmul.f32 %v664, %v175
    %v688 = vmul.f32 %v668, %v176
    %v689 = vmul.f32 %v668, %v177
    %v690 = vmul.f32 %v672, %v178
    %v691 = vmul.f32 %v672, %v179
    %v692 = vmul.f32 %v676, %v180
    %v693 = vmul.f32 %v676, %v181
    %710 = vrot.lane.b32.xlu0 %v678, 124
    %v711 = vpop.permute.xlu0 %710
    %712 = vrot.lane.b32.xlu0 %v679, 124
    %v713 = vpop.permute.xlu0 %712
    %714 = vrot.lane.b32.xlu0 %v680, 124
    %v715 = vpop.permute.xlu0 %714
    %716 = vrot.lane.b32.xlu0 %v681, 124
    %v717 = vpop.permute.xlu0 %716
    %718 = vrot.lane.b32.xlu0 %v682, 124
    %v719 = vpop.permute.xlu0 %718
    %720 = vrot.lane.b32.xlu0 %v683, 124
    %v721 = vpop.permute.xlu0 %720
    %722 = vrot.lane.b32.xlu0 %v684, 124
    %v723 = vpop.permute.xlu0 %722
    %724 = vrot.lane.b32.xlu0 %v685, 124
    %v725 = vpop.permute.xlu0 %724
    %726 = vrot.lane.b32.xlu0 %v686, 124
    %v727 = vpop.permute.xlu0 %726
    %728 = vrot.lane.b32.xlu0 %v687, 124
    %v729 = vpop.permute.xlu0 %728
    %730 = vrot.lane.b32.xlu0 %v688, 124
    %v731 = vpop.permute.xlu0 %730
    %732 = vrot.lane.b32.xlu0 %v689, 124
    %v733 = vpop.permute.xlu0 %732
    %734 = vrot.lane.b32.xlu0 %v690, 124
    %v735 = vpop.permute.xlu0 %734
    %736 = vrot.lane.b32.xlu0 %v691, 124
    %v737 = vpop.permute.xlu0 %736
    %738 = vrot.lane.b32.xlu0 %v692, 124
    %v739 = vpop.permute.xlu0 %738
    %740 = vrot.lane.b32.xlu0 %v693, 124
    %v741 = vpop.permute.xlu0 %740
    %v758 = vadd.f32 %v630, %v711
    %v759 = vadd.f32 %v631, %v713
    %v760 = vadd.f32 %v632, %v715
    %v761 = vadd.f32 %v633, %v717
    %v762 = vadd.f32 %v634, %v719
    %v763 = vadd.f32 %v635, %v721
    %v764 = vadd.f32 %v636, %v723
    %v765 = vadd.f32 %v637, %v725
    %v766 = vadd.f32 %v638, %v727
    %v767 = vadd.f32 %v639, %v729
    %v768 = vadd.f32 %v640, %v731
    %v769 = vadd.f32 %v641, %v733
    %v770 = vadd.f32 %v642, %v735
    %v771 = vadd.f32 %v643, %v737
    %v772 = vadd.f32 %v644, %v739
    %v773 = vadd.f32 %v645, %v741
    %774 = vset.pattern.permute.xlu0 5
    %775 = vperm.xlu0 %774, %v190
    %v776 = vpop.permute.xlu0 %775
    %778 = vset.pattern.permute.xlu0 5
    %779 = vperm.xlu0 %778, %v191
    %v780 = vpop.permute.xlu0 %779
    %782 = vset.pattern.permute.xlu0 5
    %783 = vperm.xlu0 %782, %v192
    %v784 = vpop.permute.xlu0 %783
    %786 = vset.pattern.permute.xlu0 5
    %787 = vperm.xlu0 %786, %v193
    %v788 = vpop.permute.xlu0 %787
    %790 = vset.pattern.permute.xlu0 5
    %791 = vperm.xlu0 %790, %v194
    %v792 = vpop.permute.xlu0 %791
    %794 = vset.pattern.permute.xlu0 5
    %795 = vperm.xlu0 %794, %v195
    %v796 = vpop.permute.xlu0 %795
    %798 = vset.pattern.permute.xlu0 5
    %799 = vperm.xlu0 %798, %v196
    %v800 = vpop.permute.xlu0 %799
    %802 = vset.pattern.permute.xlu0 5
    %803 = vperm.xlu0 %802, %v197
    %v804 = vpop.permute.xlu0 %803
    %v806 = vmul.f32 %v776, %v166
    %v807 = vmul.f32 %v776, %v167
    %v808 = vmul.f32 %v780, %v168
    %v809 = vmul.f32 %v780, %v169
    %v810 = vmul.f32 %v784, %v170
    %v811 = vmul.f32 %v784, %v171
    %v812 = vmul.f32 %v788, %v172
    %v813 = vmul.f32 %v788, %v173
    %v814 = vmul.f32 %v792, %v174
    %v815 = vmul.f32 %v792, %v175
    %v816 = vmul.f32 %v796, %v176
    %v817 = vmul.f32 %v796, %v177
    %v818 = vmul.f32 %v800, %v178
    %v819 = vmul.f32 %v800, %v179
    %v820 = vmul.f32 %v804, %v180
    %v821 = vmul.f32 %v804, %v181
    %838 = vrot.lane.b32.xlu0 %v806, 123
    %v839 = vpop.permute.xlu0 %838
    %840 = vrot.lane.b32.xlu0 %v807, 123
    %v841 = vpop.permute.xlu0 %840
    %842 = vrot.lane.b32.xlu0 %v808, 123
    %v843 = vpop.permute.xlu0 %842
    %844 = vrot.lane.b32.xlu0 %v809, 123
    %v845 = vpop.permute.xlu0 %844
    %846 = vrot.lane.b32.xlu0 %v810, 123
    %v847 = vpop.permute.xlu0 %846
    %848 = vrot.lane.b32.xlu0 %v811, 123
    %v849 = vpop.permute.xlu0 %848
    %850 = vrot.lane.b32.xlu0 %v812, 123
    %v851 = vpop.permute.xlu0 %850
    %852 = vrot.lane.b32.xlu0 %v813, 123
    %v853 = vpop.permute.xlu0 %852
    %854 = vrot.lane.b32.xlu0 %v814, 123
    %v855 = vpop.permute.xlu0 %854
    %856 = vrot.lane.b32.xlu0 %v815, 123
    %v857 = vpop.permute.xlu0 %856
    %858 = vrot.lane.b32.xlu0 %v816, 123
    %v859 = vpop.permute.xlu0 %858
    %860 = vrot.lane.b32.xlu0 %v817, 123
    %v861 = vpop.permute.xlu0 %860
    %862 = vrot.lane.b32.xlu0 %v818, 123
    %v863 = vpop.permute.xlu0 %862
    %864 = vrot.lane.b32.xlu0 %v819, 123
    %v865 = vpop.permute.xlu0 %864
    %866 = vrot.lane.b32.xlu0 %v820, 123
    %v867 = vpop.permute.xlu0 %866
    %868 = vrot.lane.b32.xlu0 %v821, 123
    %v869 = vpop.permute.xlu0 %868
    %v886 = vadd.f32 %v758, %v839
    %v887 = vadd.f32 %v759, %v841
    %v888 = vadd.f32 %v760, %v843
    %v889 = vadd.f32 %v761, %v845
    %v890 = vadd.f32 %v762, %v847
    %v891 = vadd.f32 %v763, %v849
    %v892 = vadd.f32 %v764, %v851
    %v893 = vadd.f32 %v765, %v853
    %v894 = vadd.f32 %v766, %v855
    %v895 = vadd.f32 %v767, %v857
    %v896 = vadd.f32 %v768, %v859
    %v897 = vadd.f32 %v769, %v861
    %v898 = vadd.f32 %v770, %v863
    %v899 = vadd.f32 %v771, %v865
    %v900 = vadd.f32 %v772, %v867
    %v901 = vadd.f32 %v773, %v869
    %902 = vset.pattern.permute.xlu0 6
    %903 = vperm.xlu0 %902, %v190
    %v904 = vpop.permute.xlu0 %903
    %906 = vset.pattern.permute.xlu0 6
    %907 = vperm.xlu0 %906, %v191
    %v908 = vpop.permute.xlu0 %907
    %910 = vset.pattern.permute.xlu0 6
    %911 = vperm.xlu0 %910, %v192
    %v912 = vpop.permute.xlu0 %911
    %914 = vset.pattern.permute.xlu0 6
    %915 = vperm.xlu0 %914, %v193
    %v916 = vpop.permute.xlu0 %915
    %918 = vset.pattern.permute.xlu0 6
    %919 = vperm.xlu0 %918, %v194
    %v920 = vpop.permute.xlu0 %919
    %922 = vset.pattern.permute.xlu0 6
    %923 = vperm.xlu0 %922, %v195
    %v924 = vpop.permute.xlu0 %923
    %926 = vset.pattern.permute.xlu0 6
    %927 = vperm.xlu0 %926, %v196
    %v928 = vpop.permute.xlu0 %927
    %930 = vset.pattern.permute.xlu0 6
    %931 = vperm.xlu0 %930, %v197
    %v932 = vpop.permute.xlu0 %931
    %v934 = vmul.f32 %v904, %v166
    %v935 = vmul.f32 %v904, %v167
    %v936 = vmul.f32 %v908, %v168
    %v937 = vmul.f32 %v908, %v169
    %v938 = vmul.f32 %v912, %v170
    %v939 = vmul.f32 %v912, %v171
    %v940 = vmul.f32 %v916, %v172
    %v941 = vmul.f32 %v916, %v173
    %v942 = vmul.f32 %v920, %v174
    %v943 = vmul.f32 %v920, %v175
    %v944 = vmul.f32 %v924, %v176
    %v945 = vmul.f32 %v924, %v177
    %v946 = vmul.f32 %v928, %v178
    %v947 = vmul.f32 %v928, %v179
    %v948 = vmul.f32 %v932, %v180
    %v949 = vmul.f32 %v932, %v181
    %966 = vrot.lane.b32.xlu0 %v934, 122
    %v967 = vpop.permute.xlu0 %966
    %968 = vrot.lane.b32.xlu0 %v935, 122
    %v969 = vpop.permute.xlu0 %968
    %970 = vrot.lane.b32.xlu0 %v936, 122
    %v971 = vpop.permute.xlu0 %970
    %972 = vrot.lane.b32.xlu0 %v937, 122
    %v973 = vpop.permute.xlu0 %972
    %974 = vrot.lane.b32.xlu0 %v938, 122
    %v975 = vpop.permute.xlu0 %974
    %976 = vrot.lane.b32.xlu0 %v939, 122
    %v977 = vpop.permute.xlu0 %976
    %978 = vrot.lane.b32.xlu0 %v940, 122
    %v979 = vpop.permute.xlu0 %978
    %980 = vrot.lane.b32.xlu0 %v941, 122
    %v981 = vpop.permute.xlu0 %980
    %982 = vrot.lane.b32.xlu0 %v942, 122
    %v983 = vpop.permute.xlu0 %982
    %984 = vrot.lane.b32.xlu0 %v943, 122
    %v985 = vpop.permute.xlu0 %984
    %986 = vrot.lane.b32.xlu0 %v944, 122
    %v987 = vpop.permute.xlu0 %986
    %988 = vrot.lane.b32.xlu0 %v945, 122
    %v989 = vpop.permute.xlu0 %988
    %990 = vrot.lane.b32.xlu0 %v946, 122
    %v991 = vpop.permute.xlu0 %990
    %992 = vrot.lane.b32.xlu0 %v947, 122
    %v993 = vpop.permute.xlu0 %992
    %994 = vrot.lane.b32.xlu0 %v948, 122
    %v995 = vpop.permute.xlu0 %994
    %996 = vrot.lane.b32.xlu0 %v949, 122
    %v997 = vpop.permute.xlu0 %996
    %v1014 = vadd.f32 %v886, %v967
    %v1015 = vadd.f32 %v887, %v969
    %v1016 = vadd.f32 %v888, %v971
    %v1017 = vadd.f32 %v889, %v973
    %v1018 = vadd.f32 %v890, %v975
    %v1019 = vadd.f32 %v891, %v977
    %v1020 = vadd.f32 %v892, %v979
    %v1021 = vadd.f32 %v893, %v981
    %v1022 = vadd.f32 %v894, %v983
    %v1023 = vadd.f32 %v895, %v985
    %v1024 = vadd.f32 %v896, %v987
    %v1025 = vadd.f32 %v897, %v989
    %v1026 = vadd.f32 %v898, %v991
    %v1027 = vadd.f32 %v899, %v993
    %v1028 = vadd.f32 %v900, %v995
    %v1029 = vadd.f32 %v901, %v997
    %1030 = vset.pattern.permute.xlu0 7
    %1031 = vperm.xlu0 %1030, %v190
    %v1032 = vpop.permute.xlu0 %1031
    %1034 = vset.pattern.permute.xlu0 7
    %1035 = vperm.xlu0 %1034, %v191
    %v1036 = vpop.permute.xlu0 %1035
    %1038 = vset.pattern.permute.xlu0 7
    %1039 = vperm.xlu0 %1038, %v192
    %v1040 = vpop.permute.xlu0 %1039
    %1042 = vset.pattern.permute.xlu0 7
    %1043 = vperm.xlu0 %1042, %v193
    %v1044 = vpop.permute.xlu0 %1043
    %1046 = vset.pattern.permute.xlu0 7
    %1047 = vperm.xlu0 %1046, %v194
    %v1048 = vpop.permute.xlu0 %1047
    %1050 = vset.pattern.permute.xlu0 7
    %1051 = vperm.xlu0 %1050, %v195
    %v1052 = vpop.permute.xlu0 %1051
    %1054 = vset.pattern.permute.xlu0 7
    %1055 = vperm.xlu0 %1054, %v196
    %v1056 = vpop.permute.xlu0 %1055
    %1058 = vset.pattern.permute.xlu0 7
    %1059 = vperm.xlu0 %1058, %v197
    %v1060 = vpop.permute.xlu0 %1059
    %v1062 = vmul.f32 %v1032, %v166
    %v1063 = vmul.f32 %v1032, %v167
    %v1064 = vmul.f32 %v1036, %v168
    %v1065 = vmul.f32 %v1036, %v169
    %v1066 = vmul.f32 %v1040, %v170
    %v1067 = vmul.f32 %v1040, %v171
    %v1068 = vmul.f32 %v1044, %v172
    %v1069 = vmul.f32 %v1044, %v173
    %v1070 = vmul.f32 %v1048, %v174
    %v1071 = vmul.f32 %v1048, %v175
    %v1072 = vmul.f32 %v1052, %v176
    %v1073 = vmul.f32 %v1052, %v177
    %v1074 = vmul.f32 %v1056, %v178
    %v1075 = vmul.f32 %v1056, %v179
    %v1076 = vmul.f32 %v1060, %v180
    %v1077 = vmul.f32 %v1060, %v181
    %1094 = vrot.lane.b32.xlu0 %v1062, 121
    %v1095 = vpop.permute.xlu0 %1094
    %1096 = vrot.lane.b32.xlu0 %v1063, 121
    %v1097 = vpop.permute.xlu0 %1096
    %1098 = vrot.lane.b32.xlu0 %v1064, 121
    %v1099 = vpop.permute.xlu0 %1098
    %1100 = vrot.lane.b32.xlu0 %v1065, 121
    %v1101 = vpop.permute.xlu0 %1100
    %1102 = vrot.lane.b32.xlu0 %v1066, 121
    %v1103 = vpop.permute.xlu0 %1102
    %1104 = vrot.lane.b32.xlu0 %v1067, 121
    %v1105 = vpop.permute.xlu0 %1104
    %1106 = vrot.lane.b32.xlu0 %v1068, 121
    %v1107 = vpop.permute.xlu0 %1106
    %1108 = vrot.lane.b32.xlu0 %v1069, 121
    %v1109 = vpop.permute.xlu0 %1108
    %1110 = vrot.lane.b32.xlu0 %v1070, 121
    %v1111 = vpop.permute.xlu0 %1110
    %1112 = vrot.lane.b32.xlu0 %v1071, 121
    %v1113 = vpop.permute.xlu0 %1112
    %1114 = vrot.lane.b32.xlu0 %v1072, 121
    %v1115 = vpop.permute.xlu0 %1114
    %1116 = vrot.lane.b32.xlu0 %v1073, 121
    %v1117 = vpop.permute.xlu0 %1116
    %1118 = vrot.lane.b32.xlu0 %v1074, 121
    %v1119 = vpop.permute.xlu0 %1118
    %1120 = vrot.lane.b32.xlu0 %v1075, 121
    %v1121 = vpop.permute.xlu0 %1120
    %1122 = vrot.lane.b32.xlu0 %v1076, 121
    %v1123 = vpop.permute.xlu0 %1122
    %1124 = vrot.lane.b32.xlu0 %v1077, 121
    %v1125 = vpop.permute.xlu0 %1124
    %v1142 = vadd.f32 %v1014, %v1095
    %v1143 = vadd.f32 %v1015, %v1097
    %v1144 = vadd.f32 %v1016, %v1099
    %v1145 = vadd.f32 %v1017, %v1101
    %v1146 = vadd.f32 %v1018, %v1103
    %v1147 = vadd.f32 %v1019, %v1105
    %v1148 = vadd.f32 %v1020, %v1107
    %v1149 = vadd.f32 %v1021, %v1109
    %v1150 = vadd.f32 %v1022, %v1111
    %v1151 = vadd.f32 %v1023, %v1113
    %v1152 = vadd.f32 %v1024, %v1115
    %v1153 = vadd.f32 %v1025, %v1117
    %v1154 = vadd.f32 %v1026, %v1119
    %v1155 = vadd.f32 %v1027, %v1121
    %v1156 = vadd.f32 %v1028, %v1123
    %v1157 = vadd.f32 %v1029, %v1125
    %1158 = vset.pattern.permute.xlu0 8
    %1159 = vperm.xlu0 %1158, %v190
    %v1160 = vpop.permute.xlu0 %1159
    %1162 = vset.pattern.permute.xlu0 8
    %1163 = vperm.xlu0 %1162, %v191
    %v1164 = vpop.permute.xlu0 %1163
    %1166 = vset.pattern.permute.xlu0 8
    %1167 = vperm.xlu0 %1166, %v192
    %v1168 = vpop.permute.xlu0 %1167
    %1170 = vset.pattern.permute.xlu0 8
    %1171 = vperm.xlu0 %1170, %v193
    %v1172 = vpop.permute.xlu0 %1171
    %1174 = vset.pattern.permute.xlu0 8
    %1175 = vperm.xlu0 %1174, %v194
    %v1176 = vpop.permute.xlu0 %1175
    %1178 = vset.pattern.permute.xlu0 8
    %1179 = vperm.xlu0 %1178, %v195
    %v1180 = vpop.permute.xlu0 %1179
    %1182 = vset.pattern.permute.xlu0 8
    %1183 = vperm.xlu0 %1182, %v196
    %v1184 = vpop.permute.xlu0 %1183
    %1186 = vset.pattern.permute.xlu0 8
    %1187 = vperm.xlu0 %1186, %v197
    %v1188 = vpop.permute.xlu0 %1187
    %v1190 = vmul.f32 %v1160, %v166
    %v1191 = vmul.f32 %v1160, %v167
    %v1192 = vmul.f32 %v1164, %v168
    %v1193 = vmul.f32 %v1164, %v169
    %v1194 = vmul.f32 %v1168, %v170
    %v1195 = vmul.f32 %v1168, %v171
    %v1196 = vmul.f32 %v1172, %v172
    %v1197 = vmul.f32 %v1172, %v173
    %v1198 = vmul.f32 %v1176, %v174
    %v1199 = vmul.f32 %v1176, %v175
    %v1200 = vmul.f32 %v1180, %v176
    %v1201 = vmul.f32 %v1180, %v177
    %v1202 = vmul.f32 %v1184, %v178
    %v1203 = vmul.f32 %v1184, %v179
    %v1204 = vmul.f32 %v1188, %v180
    %v1205 = vmul.f32 %v1188, %v181
    %1222 = vrot.lane.b32.xlu0 %v1190, 120
    %v1223 = vpop.permute.xlu0 %1222
    %1224 = vrot.lane.b32.xlu0 %v1191, 120
    %v1225 = vpop.permute.xlu0 %1224
    %1226 = vrot.lane.b32.xlu0 %v1192, 120
    %v1227 = vpop.permute.xlu0 %1226
    %1228 = vrot.lane.b32.xlu0 %v1193, 120
    %v1229 = vpop.permute.xlu0 %1228
    %1230 = vrot.lane.b32.xlu0 %v1194, 120
    %v1231 = vpop.permute.xlu0 %1230
    %1232 = vrot.lane.b32.xlu0 %v1195, 120
    %v1233 = vpop.permute.xlu0 %1232
    %1234 = vrot.lane.b32.xlu0 %v1196, 120
    %v1235 = vpop.permute.xlu0 %1234
    %1236 = vrot.lane.b32.xlu0 %v1197, 120
    %v1237 = vpop.permute.xlu0 %1236
    %1238 = vrot.lane.b32.xlu0 %v1198, 120
    %v1239 = vpop.permute.xlu0 %1238
    %1240 = vrot.lane.b32.xlu0 %v1199, 120
    %v1241 = vpop.permute.xlu0 %1240
    %1242 = vrot.lane.b32.xlu0 %v1200, 120
    %v1243 = vpop.permute.xlu0 %1242
    %1244 = vrot.lane.b32.xlu0 %v1201, 120
    %v1245 = vpop.permute.xlu0 %1244
    %1246 = vrot.lane.b32.xlu0 %v1202, 120
    %v1247 = vpop.permute.xlu0 %1246
    %1248 = vrot.lane.b32.xlu0 %v1203, 120
    %v1249 = vpop.permute.xlu0 %1248
    %1250 = vrot.lane.b32.xlu0 %v1204, 120
    %v1251 = vpop.permute.xlu0 %1250
    %1252 = vrot.lane.b32.xlu0 %v1205, 120
    %v1253 = vpop.permute.xlu0 %1252
    %v1270 = vadd.f32 %v1142, %v1223
    %v1271 = vadd.f32 %v1143, %v1225
    %v1272 = vadd.f32 %v1144, %v1227
    %v1273 = vadd.f32 %v1145, %v1229
    %v1274 = vadd.f32 %v1146, %v1231
    %v1275 = vadd.f32 %v1147, %v1233
    %v1276 = vadd.f32 %v1148, %v1235
    %v1277 = vadd.f32 %v1149, %v1237
    %v1278 = vadd.f32 %v1150, %v1239
    %v1279 = vadd.f32 %v1151, %v1241
    %v1280 = vadd.f32 %v1152, %v1243
    %v1281 = vadd.f32 %v1153, %v1245
    %v1282 = vadd.f32 %v1154, %v1247
    %v1283 = vadd.f32 %v1155, %v1249
    %v1284 = vadd.f32 %v1156, %v1251
    %v1285 = vadd.f32 %v1157, %v1253
    %1286 = vset.pattern.permute.xlu0 9
    %1287 = vperm.xlu0 %1286, %v190
    %v1288 = vpop.permute.xlu0 %1287
    %1290 = vset.pattern.permute.xlu0 9
    %1291 = vperm.xlu0 %1290, %v191
    %v1292 = vpop.permute.xlu0 %1291
    %1294 = vset.pattern.permute.xlu0 9
    %1295 = vperm.xlu0 %1294, %v192
    %v1296 = vpop.permute.xlu0 %1295
    %1298 = vset.pattern.permute.xlu0 9
    %1299 = vperm.xlu0 %1298, %v193
    %v1300 = vpop.permute.xlu0 %1299
    %1302 = vset.pattern.permute.xlu0 9
    %1303 = vperm.xlu0 %1302, %v194
    %v1304 = vpop.permute.xlu0 %1303
    %1306 = vset.pattern.permute.xlu0 9
    %1307 = vperm.xlu0 %1306, %v195
    %v1308 = vpop.permute.xlu0 %1307
    %1310 = vset.pattern.permute.xlu0 9
    %1311 = vperm.xlu0 %1310, %v196
    %v1312 = vpop.permute.xlu0 %1311
    %1314 = vset.pattern.permute.xlu0 9
    %1315 = vperm.xlu0 %1314, %v197
    %v1316 = vpop.permute.xlu0 %1315
    %v1318 = vmul.f32 %v1288, %v166
    %v1319 = vmul.f32 %v1288, %v167
    %v1320 = vmul.f32 %v1292, %v168
    %v1321 = vmul.f32 %v1292, %v169
    %v1322 = vmul.f32 %v1296, %v170
    %v1323 = vmul.f32 %v1296, %v171
    %v1324 = vmul.f32 %v1300, %v172
    %v1325 = vmul.f32 %v1300, %v173
    %v1326 = vmul.f32 %v1304, %v174
    %v1327 = vmul.f32 %v1304, %v175
    %v1328 = vmul.f32 %v1308, %v176
    %v1329 = vmul.f32 %v1308, %v177
    %v1330 = vmul.f32 %v1312, %v178
    %v1331 = vmul.f32 %v1312, %v179
    %v1332 = vmul.f32 %v1316, %v180
    %v1333 = vmul.f32 %v1316, %v181
    %1350 = vrot.lane.b32.xlu0 %v1318, 119
    %v1351 = vpop.permute.xlu0 %1350
    %1352 = vrot.lane.b32.xlu0 %v1319, 119
    %v1353 = vpop.permute.xlu0 %1352
    %1354 = vrot.lane.b32.xlu0 %v1320, 119
    %v1355 = vpop.permute.xlu0 %1354
    %1356 = vrot.lane.b32.xlu0 %v1321, 119
    %v1357 = vpop.permute.xlu0 %1356
    %1358 = vrot.lane.b32.xlu0 %v1322, 119
    %v1359 = vpop.permute.xlu0 %1358
    %1360 = vrot.lane.b32.xlu0 %v1323, 119
    %v1361 = vpop.permute.xlu0 %1360
    %1362 = vrot.lane.b32.xlu0 %v1324, 119
    %v1363 = vpop.permute.xlu0 %1362
    %1364 = vrot.lane.b32.xlu0 %v1325, 119
    %v1365 = vpop.permute.xlu0 %1364
    %1366 = vrot.lane.b32.xlu0 %v1326, 119
    %v1367 = vpop.permute.xlu0 %1366
    %1368 = vrot.lane.b32.xlu0 %v1327, 119
    %v1369 = vpop.permute.xlu0 %1368
    %1370 = vrot.lane.b32.xlu0 %v1328, 119
    %v1371 = vpop.permute.xlu0 %1370
    %1372 = vrot.lane.b32.xlu0 %v1329, 119
    %v1373 = vpop.permute.xlu0 %1372
    %1374 = vrot.lane.b32.xlu0 %v1330, 119
    %v1375 = vpop.permute.xlu0 %1374
    %1376 = vrot.lane.b32.xlu0 %v1331, 119
    %v1377 = vpop.permute.xlu0 %1376
    %1378 = vrot.lane.b32.xlu0 %v1332, 119
    %v1379 = vpop.permute.xlu0 %1378
    %1380 = vrot.lane.b32.xlu0 %v1333, 119
    %v1381 = vpop.permute.xlu0 %1380
    %v1398 = vadd.f32 %v1270, %v1351
    %v1399 = vadd.f32 %v1271, %v1353
    %v1400 = vadd.f32 %v1272, %v1355
    %v1401 = vadd.f32 %v1273, %v1357
    %v1402 = vadd.f32 %v1274, %v1359
    %v1403 = vadd.f32 %v1275, %v1361
    %v1404 = vadd.f32 %v1276, %v1363
    %v1405 = vadd.f32 %v1277, %v1365
    %v1406 = vadd.f32 %v1278, %v1367
    %v1407 = vadd.f32 %v1279, %v1369
    %v1408 = vadd.f32 %v1280, %v1371
    %v1409 = vadd.f32 %v1281, %v1373
    %v1410 = vadd.f32 %v1282, %v1375
    %v1411 = vadd.f32 %v1283, %v1377
    %v1412 = vadd.f32 %v1284, %v1379
    %v1413 = vadd.f32 %v1285, %v1381
    %1414 = vset.pattern.permute.xlu0 10
    %1415 = vperm.xlu0 %1414, %v190
    %v1416 = vpop.permute.xlu0 %1415
    %1418 = vset.pattern.permute.xlu0 10
    %1419 = vperm.xlu0 %1418, %v191
    %v1420 = vpop.permute.xlu0 %1419
    %1422 = vset.pattern.permute.xlu0 10
    %1423 = vperm.xlu0 %1422, %v192
    %v1424 = vpop.permute.xlu0 %1423
    %1426 = vset.pattern.permute.xlu0 10
    %1427 = vperm.xlu0 %1426, %v193
    %v1428 = vpop.permute.xlu0 %1427
    %1430 = vset.pattern.permute.xlu0 10
    %1431 = vperm.xlu0 %1430, %v194
    %v1432 = vpop.permute.xlu0 %1431
    %1434 = vset.pattern.permute.xlu0 10
    %1435 = vperm.xlu0 %1434, %v195
    %v1436 = vpop.permute.xlu0 %1435
    %1438 = vset.pattern.permute.xlu0 10
    %1439 = vperm.xlu0 %1438, %v196
    %v1440 = vpop.permute.xlu0 %1439
    %1442 = vset.pattern.permute.xlu0 10
    %1443 = vperm.xlu0 %1442, %v197
    %v1444 = vpop.permute.xlu0 %1443
    %v1446 = vmul.f32 %v1416, %v166
    %v1447 = vmul.f32 %v1416, %v167
    %v1448 = vmul.f32 %v1420, %v168
    %v1449 = vmul.f32 %v1420, %v169
    %v1450 = vmul.f32 %v1424, %v170
    %v1451 = vmul.f32 %v1424, %v171
    %v1452 = vmul.f32 %v1428, %v172
    %v1453 = vmul.f32 %v1428, %v173
    %v1454 = vmul.f32 %v1432, %v174
    %v1455 = vmul.f32 %v1432, %v175
    %v1456 = vmul.f32 %v1436, %v176
    %v1457 = vmul.f32 %v1436, %v177
    %v1458 = vmul.f32 %v1440, %v178
    %v1459 = vmul.f32 %v1440, %v179
    %v1460 = vmul.f32 %v1444, %v180
    %v1461 = vmul.f32 %v1444, %v181
    %1478 = vrot.lane.b32.xlu0 %v1446, 118
    %v1479 = vpop.permute.xlu0 %1478
    %1480 = vrot.lane.b32.xlu0 %v1447, 118
    %v1481 = vpop.permute.xlu0 %1480
    %1482 = vrot.lane.b32.xlu0 %v1448, 118
    %v1483 = vpop.permute.xlu0 %1482
    %1484 = vrot.lane.b32.xlu0 %v1449, 118
    %v1485 = vpop.permute.xlu0 %1484
    %1486 = vrot.lane.b32.xlu0 %v1450, 118
    %v1487 = vpop.permute.xlu0 %1486
    %1488 = vrot.lane.b32.xlu0 %v1451, 118
    %v1489 = vpop.permute.xlu0 %1488
    %1490 = vrot.lane.b32.xlu0 %v1452, 118
    %v1491 = vpop.permute.xlu0 %1490
    %1492 = vrot.lane.b32.xlu0 %v1453, 118
    %v1493 = vpop.permute.xlu0 %1492
    %1494 = vrot.lane.b32.xlu0 %v1454, 118
    %v1495 = vpop.permute.xlu0 %1494
    %1496 = vrot.lane.b32.xlu0 %v1455, 118
    %v1497 = vpop.permute.xlu0 %1496
    %1498 = vrot.lane.b32.xlu0 %v1456, 118
    %v1499 = vpop.permute.xlu0 %1498
    %1500 = vrot.lane.b32.xlu0 %v1457, 118
    %v1501 = vpop.permute.xlu0 %1500
    %1502 = vrot.lane.b32.xlu0 %v1458, 118
    %v1503 = vpop.permute.xlu0 %1502
    %1504 = vrot.lane.b32.xlu0 %v1459, 118
    %v1505 = vpop.permute.xlu0 %1504
    %1506 = vrot.lane.b32.xlu0 %v1460, 118
    %v1507 = vpop.permute.xlu0 %1506
    %1508 = vrot.lane.b32.xlu0 %v1461, 118
    %v1509 = vpop.permute.xlu0 %1508
    %v1526 = vadd.f32 %v1398, %v1479
    %v1527 = vadd.f32 %v1399, %v1481
    %v1528 = vadd.f32 %v1400, %v1483
    %v1529 = vadd.f32 %v1401, %v1485
    %v1530 = vadd.f32 %v1402, %v1487
    %v1531 = vadd.f32 %v1403, %v1489
    %v1532 = vadd.f32 %v1404, %v1491
    %v1533 = vadd.f32 %v1405, %v1493
    %v1534 = vadd.f32 %v1406, %v1495
    %v1535 = vadd.f32 %v1407, %v1497
    %v1536 = vadd.f32 %v1408, %v1499
    %v1537 = vadd.f32 %v1409, %v1501
    %v1538 = vadd.f32 %v1410, %v1503
    %v1539 = vadd.f32 %v1411, %v1505
    %v1540 = vadd.f32 %v1412, %v1507
    %v1541 = vadd.f32 %v1413, %v1509
    %1542 = vset.pattern.permute.xlu0 11
    %1543 = vperm.xlu0 %1542, %v190
    %v1544 = vpop.permute.xlu0 %1543
    %1546 = vset.pattern.permute.xlu0 11
    %1547 = vperm.xlu0 %1546, %v191
    %v1548 = vpop.permute.xlu0 %1547
    %1550 = vset.pattern.permute.xlu0 11
    %1551 = vperm.xlu0 %1550, %v192
    %v1552 = vpop.permute.xlu0 %1551
    %1554 = vset.pattern.permute.xlu0 11
    %1555 = vperm.xlu0 %1554, %v193
    %v1556 = vpop.permute.xlu0 %1555
    %1558 = vset.pattern.permute.xlu0 11
    %1559 = vperm.xlu0 %1558, %v194
    %v1560 = vpop.permute.xlu0 %1559
    %1562 = vset.pattern.permute.xlu0 11
    %1563 = vperm.xlu0 %1562, %v195
    %v1564 = vpop.permute.xlu0 %1563
    %1566 = vset.pattern.permute.xlu0 11
    %1567 = vperm.xlu0 %1566, %v196
    %v1568 = vpop.permute.xlu0 %1567
    %1570 = vset.pattern.permute.xlu0 11
    %1571 = vperm.xlu0 %1570, %v197
    %v1572 = vpop.permute.xlu0 %1571
    %v1574 = vmul.f32 %v1544, %v166
    %v1575 = vmul.f32 %v1544, %v167
    %v1576 = vmul.f32 %v1548, %v168
    %v1577 = vmul.f32 %v1548, %v169
    %v1578 = vmul.f32 %v1552, %v170
    %v1579 = vmul.f32 %v1552, %v171
    %v1580 = vmul.f32 %v1556, %v172
    %v1581 = vmul.f32 %v1556, %v173
    %v1582 = vmul.f32 %v1560, %v174
    %v1583 = vmul.f32 %v1560, %v175
    %v1584 = vmul.f32 %v1564, %v176
    %v1585 = vmul.f32 %v1564, %v177
    %v1586 = vmul.f32 %v1568, %v178
    %v1587 = vmul.f32 %v1568, %v179
    %v1588 = vmul.f32 %v1572, %v180
    %v1589 = vmul.f32 %v1572, %v181
    %1606 = vrot.lane.b32.xlu0 %v1574, 117
    %v1607 = vpop.permute.xlu0 %1606
    %1608 = vrot.lane.b32.xlu0 %v1575, 117
    %v1609 = vpop.permute.xlu0 %1608
    %1610 = vrot.lane.b32.xlu0 %v1576, 117
    %v1611 = vpop.permute.xlu0 %1610
    %1612 = vrot.lane.b32.xlu0 %v1577, 117
    %v1613 = vpop.permute.xlu0 %1612
    %1614 = vrot.lane.b32.xlu0 %v1578, 117
    %v1615 = vpop.permute.xlu0 %1614
    %1616 = vrot.lane.b32.xlu0 %v1579, 117
    %v1617 = vpop.permute.xlu0 %1616
    %1618 = vrot.lane.b32.xlu0 %v1580, 117
    %v1619 = vpop.permute.xlu0 %1618
    %1620 = vrot.lane.b32.xlu0 %v1581, 117
    %v1621 = vpop.permute.xlu0 %1620
    %1622 = vrot.lane.b32.xlu0 %v1582, 117
    %v1623 = vpop.permute.xlu0 %1622
    %1624 = vrot.lane.b32.xlu0 %v1583, 117
    %v1625 = vpop.permute.xlu0 %1624
    %1626 = vrot.lane.b32.xlu0 %v1584, 117
    %v1627 = vpop.permute.xlu0 %1626
    %1628 = vrot.lane.b32.xlu0 %v1585, 117
    %v1629 = vpop.permute.xlu0 %1628
    %1630 = vrot.lane.b32.xlu0 %v1586, 117
    %v1631 = vpop.permute.xlu0 %1630
    %1632 = vrot.lane.b32.xlu0 %v1587, 117
    %v1633 = vpop.permute.xlu0 %1632
    %1634 = vrot.lane.b32.xlu0 %v1588, 117
    %v1635 = vpop.permute.xlu0 %1634
    %1636 = vrot.lane.b32.xlu0 %v1589, 117
    %v1637 = vpop.permute.xlu0 %1636
    %v1654 = vadd.f32 %v1526, %v1607
    %v1655 = vadd.f32 %v1527, %v1609
    %v1656 = vadd.f32 %v1528, %v1611
    %v1657 = vadd.f32 %v1529, %v1613
    %v1658 = vadd.f32 %v1530, %v1615
    %v1659 = vadd.f32 %v1531, %v1617
    %v1660 = vadd.f32 %v1532, %v1619
    %v1661 = vadd.f32 %v1533, %v1621
    %v1662 = vadd.f32 %v1534, %v1623
    %v1663 = vadd.f32 %v1535, %v1625
    %v1664 = vadd.f32 %v1536, %v1627
    %v1665 = vadd.f32 %v1537, %v1629
    %v1666 = vadd.f32 %v1538, %v1631
    %v1667 = vadd.f32 %v1539, %v1633
    %v1668 = vadd.f32 %v1540, %v1635
    %v1669 = vadd.f32 %v1541, %v1637
    %1670 = vset.pattern.permute.xlu0 12
    %1671 = vperm.xlu0 %1670, %v190
    %v1672 = vpop.permute.xlu0 %1671
    %1674 = vset.pattern.permute.xlu0 12
    %1675 = vperm.xlu0 %1674, %v191
    %v1676 = vpop.permute.xlu0 %1675
    %1678 = vset.pattern.permute.xlu0 12
    %1679 = vperm.xlu0 %1678, %v192
    %v1680 = vpop.permute.xlu0 %1679
    %1682 = vset.pattern.permute.xlu0 12
    %1683 = vperm.xlu0 %1682, %v193
    %v1684 = vpop.permute.xlu0 %1683
    %1686 = vset.pattern.permute.xlu0 12
    %1687 = vperm.xlu0 %1686, %v194
    %v1688 = vpop.permute.xlu0 %1687
    %1690 = vset.pattern.permute.xlu0 12
    %1691 = vperm.xlu0 %1690, %v195
    %v1692 = vpop.permute.xlu0 %1691
    %1694 = vset.pattern.permute.xlu0 12
    %1695 = vperm.xlu0 %1694, %v196
    %v1696 = vpop.permute.xlu0 %1695
    %1698 = vset.pattern.permute.xlu0 12
    %1699 = vperm.xlu0 %1698, %v197
    %v1700 = vpop.permute.xlu0 %1699
    %v1702 = vmul.f32 %v1672, %v166
    %v1703 = vmul.f32 %v1672, %v167
    %v1704 = vmul.f32 %v1676, %v168
    %v1705 = vmul.f32 %v1676, %v169
    %v1706 = vmul.f32 %v1680, %v170
    %v1707 = vmul.f32 %v1680, %v171
    %v1708 = vmul.f32 %v1684, %v172
    %v1709 = vmul.f32 %v1684, %v173
    %v1710 = vmul.f32 %v1688, %v174
    %v1711 = vmul.f32 %v1688, %v175
    %v1712 = vmul.f32 %v1692, %v176
    %v1713 = vmul.f32 %v1692, %v177
    %v1714 = vmul.f32 %v1696, %v178
    %v1715 = vmul.f32 %v1696, %v179
    %v1716 = vmul.f32 %v1700, %v180
    %v1717 = vmul.f32 %v1700, %v181
    %1734 = vrot.lane.b32.xlu0 %v1702, 116
    %v1735 = vpop.permute.xlu0 %1734
    %1736 = vrot.lane.b32.xlu0 %v1703, 116
    %v1737 = vpop.permute.xlu0 %1736
    %1738 = vrot.lane.b32.xlu0 %v1704, 116
    %v1739 = vpop.permute.xlu0 %1738
    %1740 = vrot.lane.b32.xlu0 %v1705, 116
    %v1741 = vpop.permute.xlu0 %1740
    %1742 = vrot.lane.b32.xlu0 %v1706, 116
    %v1743 = vpop.permute.xlu0 %1742
    %1744 = vrot.lane.b32.xlu0 %v1707, 116
    %v1745 = vpop.permute.xlu0 %1744
    %1746 = vrot.lane.b32.xlu0 %v1708, 116
    %v1747 = vpop.permute.xlu0 %1746
    %1748 = vrot.lane.b32.xlu0 %v1709, 116
    %v1749 = vpop.permute.xlu0 %1748
    %1750 = vrot.lane.b32.xlu0 %v1710, 116
    %v1751 = vpop.permute.xlu0 %1750
    %1752 = vrot.lane.b32.xlu0 %v1711, 116
    %v1753 = vpop.permute.xlu0 %1752
    %1754 = vrot.lane.b32.xlu0 %v1712, 116
    %v1755 = vpop.permute.xlu0 %1754
    %1756 = vrot.lane.b32.xlu0 %v1713, 116
    %v1757 = vpop.permute.xlu0 %1756
    %1758 = vrot.lane.b32.xlu0 %v1714, 116
    %v1759 = vpop.permute.xlu0 %1758
    %1760 = vrot.lane.b32.xlu0 %v1715, 116
    %v1761 = vpop.permute.xlu0 %1760
    %1762 = vrot.lane.b32.xlu0 %v1716, 116
    %v1763 = vpop.permute.xlu0 %1762
    %1764 = vrot.lane.b32.xlu0 %v1717, 116
    %v1765 = vpop.permute.xlu0 %1764
    %v1782 = vadd.f32 %v1654, %v1735
    %v1783 = vadd.f32 %v1655, %v1737
    %v1784 = vadd.f32 %v1656, %v1739
    %v1785 = vadd.f32 %v1657, %v1741
    %v1786 = vadd.f32 %v1658, %v1743
    %v1787 = vadd.f32 %v1659, %v1745
    %v1788 = vadd.f32 %v1660, %v1747
    %v1789 = vadd.f32 %v1661, %v1749
    %v1790 = vadd.f32 %v1662, %v1751
    %v1791 = vadd.f32 %v1663, %v1753
    %v1792 = vadd.f32 %v1664, %v1755
    %v1793 = vadd.f32 %v1665, %v1757
    %v1794 = vadd.f32 %v1666, %v1759
    %v1795 = vadd.f32 %v1667, %v1761
    %v1796 = vadd.f32 %v1668, %v1763
    %v1797 = vadd.f32 %v1669, %v1765
    %vm1798 = vcmask 130048
    %1799 = vst.msk [vmem:[#allocation8] sm:$0xff] %vm1798, %v1782
    %1800 = vst.msk [vmem:[#allocation8 + $0x8] sm:$0xff] %vm1798, %v1783
    %1801 = vst.msk [vmem:[#allocation8 + $0x10] sm:$0xff] %vm1798, %v1784
    %1802 = vst.msk [vmem:[#allocation8 + $0x18] sm:$0xff] %vm1798, %v1785
    %1803 = vst.msk [vmem:[#allocation8 + $0x20] sm:$0xff] %vm1798, %v1786
    %1804 = vst.msk [vmem:[#allocation8 + $0x28] sm:$0xff] %vm1798, %v1787
    %1805 = vst.msk [vmem:[#allocation8 + $0x30] sm:$0xff] %vm1798, %v1788
    %1806 = vst.msk [vmem:[#allocation8 + $0x38] sm:$0xff] %vm1798, %v1789
    %1807 = vst.msk [vmem:[#allocation8 + $0x40] sm:$0xff] %vm1798, %v1790
    %1808 = vst.msk [vmem:[#allocation8 + $0x48] sm:$0xff] %vm1798, %v1791
    %1809 = vst.msk [vmem:[#allocation8 + $0x50] sm:$0xff] %vm1798, %v1792
    %1810 = vst.msk [vmem:[#allocation8 + $0x58] sm:$0xff] %vm1798, %v1793
    %1811 = vst.msk [vmem:[#allocation8 + $0x60] sm:$0xff] %vm1798, %v1794
    %1812 = vst.msk [vmem:[#allocation8 + $0x68] sm:$0xff] %vm1798, %v1795
    %1813 = vst.msk [vmem:[#allocation8 + $0x70] sm:$0xff] %vm1798, %v1796
    %1814 = vst.msk [vmem:[#allocation8 + $0x78] sm:$0xff] %vm1798, %v1797
    // Predicated region
    $region18: #{tpu_custom_call.1} parent=1 // pred_check
      _
    $region19: #{tpu_custom_call.1} parent=1 // pred_check_branch
      %1816 = sbr.rel (0) target = $region21
    $region20: #{tpu_custom_call.1} parent=1 // pred_region
      %1818 = vsyncadd [#allocation5], 0
      %s1819 = sshll.u32 [#allocation8], 4
      %s1820 = int_to_ptr.vmem [resolvable:$true] %s1819
      %s1821 = sshll.u32 %s2, 4
      %s1822 = int_to_ptr.hbm [resolvable:$true] %s1821
      %1827 = dma.vmem_to_hbm [thread:$0]  %s1820, 2048, %s1822, [#allocation5], 128, 128, 8
    $region21: #{tpu_custom_call.1} parent=1 // pred_fallthru
      _
    // Predicated region
    $region22: #{tpu_custom_call.1} parent=1 // pred_check
      _
    $region23: #{tpu_custom_call.1} parent=1 // pred_check_branch
      %1829 = sbr.rel (0) target = $region25
    $region24: #{tpu_custom_call.1} parent=1 // pred_region
      %1831 = dma.done [#allocation5], 2048
    $region25: #{tpu_custom_call.1} parent=1 // pred_fallthru
      _
    %1832 = vsyncpa [#allocation4], 1
    %1833 = vsyncpa [#allocation7], 1
    %1834 = vsyncpa [#allocation5], 1

</llo_original>
